<compile_context>
chip_gen: v5e
topology: v5e:2x2
jax: 0.10.0
libtpu: 0.0.40
codegen_flags: <defaults>
</compile_context>

<pallas_src>
import jax
import jax.numpy as jnp
from jax.experimental import pallas as pl
from jax.experimental.pallas import tpu as pltpu


def _sigmoid(v):
    return 1.0 / (1.0 + jnp.exp(-v))


def _gru_layer_kernel(x_ref, w_ih_ref, w_hh_ref, b_ref, out_ref, hn_ref, gx_ref):
    """Fused (all-direction) GRU layer over one time-major batch tile.

    x_ref   : (T, Bt, D_in)           time-major input tile
    w_ih_ref: (D_in, nd*3H)           input->gates weights, pre-transposed,
                                      directions concatenated on the gate axis,
                                      gate order (r|z|n) per direction
    w_hh_ref: (nd, H, 3H)             hidden->gates weights, pre-transposed
    b_ref   : (2, nd*3H)              row 0 = b_ih, row 1 = b_hh (packed)
    out_ref : (T, Bt, nd*H)           per-step hidden states (layer output)
    hn_ref  : (Bt, nd*H)              final hidden states (fwd | bwd)
    gx_ref  : (T, Bt, nd*3H) scratch  hoisted input projections
    """
    T, Bt, D_in = x_ref.shape
    num_dirs, H, H3 = w_hh_ref.shape

    # --- hoisted input->gate projection: one big MXU matmul for all steps/dirs ---
    x_flat = x_ref[...].reshape(T * Bt, D_in)
    gx = jnp.dot(x_flat, w_ih_ref[...], preferred_element_type=jnp.float32)
    gx = gx + b_ref[0:1, :]
    gx_ref[...] = gx.reshape(T, Bt, num_dirs * H3)

    # Load recurrent weights / biases once (kept in vregs across the loop).
    w_hh = [w_hh_ref[d] for d in range(num_dirs)]
    b_hh = [b_ref[1:2, d * H3:(d + 1) * H3] for d in range(num_dirs)]

    def step(s, hs):
        new_hs = []
        for d in range(num_dirs):
            t = s if d == 0 else T - 1 - s           # backward dir walks time reversed
            gx_t = gx_ref[t][:, d * H3:(d + 1) * H3]                      # (Bt, 3H)
            gh = jnp.dot(hs[d], w_hh[d], preferred_element_type=jnp.float32) + b_hh[d]
            r = _sigmoid(gx_t[:, 0:H] + gh[:, 0:H])
            z = _sigmoid(gx_t[:, H:2 * H] + gh[:, H:2 * H])
            n = jnp.tanh(gx_t[:, 2 * H:3 * H] + r * gh[:, 2 * H:3 * H])
            h_new = (1.0 - z) * n + z * hs[d]
            out_ref[t, :, pl.ds(d * H, H)] = h_new    # direct lane-slice store
            new_hs.append(h_new)
        return tuple(new_hs)

    # init_hidden parameters are zero in the module.
    h0 = tuple(jnp.zeros((Bt, H), jnp.float32) for _ in range(num_dirs))
    h_last = jax.lax.fori_loop(0, T, step, h0, unroll=(T <= 16))
    for d in range(num_dirs):
        hn_ref[:, pl.ds(d * H, H)] = h_last[d]


def _gru_layer_pallas(x, dir_params):
    """x: (B, T, D_in); dir_params: list (1 or 2 dirs) of PyTorch-layout params
    {w_ih (3H, D_in), w_hh (3H, H), b_ih (3H,), b_hh (3H,)}."""
    B, T, D_in = x.shape
    num_dirs = len(dir_params)
    H = dir_params[0]["w_hh"].shape[1]
    H3 = 3 * H

    # Time-major layout so the recurrence indexes the leading ref axis.
    xt = jnp.transpose(x, (1, 0, 2)).astype(jnp.float32)                      # (T, B, D_in)
    w_ih = jnp.concatenate(
        [jnp.transpose(p["w_ih"]).astype(jnp.float32) for p in dir_params], axis=1)  # (D_in, nd*3H)
    w_hh = jnp.stack(
        [jnp.transpose(p["w_hh"]).astype(jnp.float32) for p in dir_params], axis=0)  # (nd, H, 3H)
    b_ih = jnp.concatenate([p["b_ih"].astype(jnp.float32) for p in dir_params], axis=0)
    b_hh = jnp.concatenate([p["b_hh"].astype(jnp.float32) for p in dir_params], axis=0)
    b = jnp.stack([b_ih, b_hh], axis=0)                                       # (2, nd*3H)

    # Batch tile: 8-aligned (sublane rule) when possible; two grid steps when the
    # batch is big enough so the "parallel" axis can shard across TensorCores.
    if B % 16 == 0:
        block_b = B // 2 if (B // 2) % 8 == 0 else 8
    elif B % 8 == 0:
        block_b = 8
    else:
        block_b = B
    grid = (B // block_b,)

    grid_spec = pltpu.PrefetchScalarGridSpec(
        num_scalar_prefetch=0,
        grid=grid,
        in_specs=[
            pl.BlockSpec((T, block_b, D_in), lambda i: (0, i, 0)),
            pl.BlockSpec((D_in, num_dirs * H3), lambda i: (0, 0)),
            pl.BlockSpec((num_dirs, H, H3), lambda i: (0, 0, 0)),
            pl.BlockSpec((2, num_dirs * H3), lambda i: (0, 0)),
        ],
        out_specs=(
            pl.BlockSpec((T, block_b, num_dirs * H), lambda i: (0, i, 0)),
            pl.BlockSpec((block_b, num_dirs * H), lambda i: (i, 0)),
        ),
        scratch_shapes=[pltpu.VMEM((T, block_b, num_dirs * H3), jnp.float32)],
    )

    out_t, hn = pl.pallas_call(
        _gru_layer_kernel,
        out_shape=(
            jax.ShapeDtypeStruct((T, B, num_dirs * H), jnp.float32),
            jax.ShapeDtypeStruct((B, num_dirs * H), jnp.float32),
        ),
        grid_spec=grid_spec,
        compiler_params=pltpu.CompilerParams(
            dimension_semantics=("parallel",)),
    )(xt, w_ih, w_hh, b)

    return jnp.transpose(out_t, (1, 0, 2)), hn        # (B, T, nd*H), (B, nd*H)


def encoder_rnn_forward(x, params, *, concat, return_last, input_lengths=None):
    """Mirrors EncoderRNN.forward (eval mode). params: [layer][direction] dicts."""
    if input_lengths is not None:
        # TODO(synk): pack_padded_sequence / pad_packed_sequence path not implemented.
        raise NotImplementedError("input_lengths handling is not implemented")

    output = x
    outputs = []
    for layer_params in params:
        # LockedDropout is identity in eval mode.
        output, hidden = _gru_layer_pallas(output, layer_params)
        outputs.append(hidden if return_last else output)

    if concat:
        return jnp.concatenate(outputs, axis=-1)
    return outputs[-1]


# ---------------------------- pure-JAX reference -----------------------------

def _gru_dir_reference(x, w_ih, w_hh, b_ih, b_hh):
    """Single-direction GRU mirroring torch.nn.GRU (gate order r, z, n)."""
    B, T, _ = x.shape
    H = w_hh.shape[1]

    def cell(h, x_t):
        gx = x_t @ w_ih.T + b_ih
        gh = h @ w_hh.T + b_hh
        r = _sigmoid(gx[:, 0:H] + gh[:, 0:H])
        z = _sigmoid(gx[:, H:2 * H] + gh[:, H:2 * H])
        n = jnp.tanh(gx[:, 2 * H:3 * H] + r * gh[:, 2 * H:3 * H])
        h_new = (1.0 - z) * n + z * h
        return h_new, h_new

    h0 = jnp.zeros((B, H), jnp.float32)
    h_last, ys = jax.lax.scan(cell, h0, jnp.transpose(x, (1, 0, 2)))
    return jnp.transpose(ys, (1, 0, 2)), h_last


def encoder_rnn_reference(x, params, *, concat, return_last):
    output = x
    outputs = []
    for layer_params in params:
        dir_outs, dir_hns = [], []
        for d, p in enumerate(layer_params):
            xin = jnp.flip(output, axis=1) if d == 1 else output
            out_d, hn_d = _gru_dir_reference(xin, p["w_ih"], p["w_hh"], p["b_ih"], p["b_hh"])
            if d == 1:
                out_d = jnp.flip(out_d, axis=1)
            dir_outs.append(out_d)
            dir_hns.append(hn_d)
        output = dir_outs[0] if len(dir_outs) == 1 else jnp.concatenate(dir_outs, axis=-1)
        hidden = dir_hns[0] if len(dir_hns) == 1 else jnp.concatenate(dir_hns, axis=-1)
        outputs.append(hidden if return_last else output)
    if concat:
        return jnp.concatenate(outputs, axis=-1)
    return outputs[-1]


def make_gru_params(key, input_size, num_units, nlayers, bidir):
    """Weights ~ N(0, 0.1) as in reset_parameters; small random biases."""
    num_dirs = 2 if bidir else 1
    layers = []
    for i in range(nlayers):
        d_in = input_size if i == 0 else num_units * num_dirs
        dirs = []
        for _ in range(num_dirs):
            key, k1, k2, k3, k4 = jax.random.split(key, 5)
            dirs.append({
                "w_ih": 0.1 * jax.random.normal(k1, (3 * num_units, d_in), jnp.float32),
                "w_hh": 0.1 * jax.random.normal(k2, (3 * num_units, num_units), jnp.float32),
                "b_ih": 0.1 * jax.random.normal(k3, (3 * num_units,), jnp.float32),
                "b_hh": 0.1 * jax.random.normal(k4, (3 * num_units,), jnp.float32),
            })
        layers.append(dirs)
    return layers, key


if __name__ == "__main__":
    key = jax.random.PRNGKey(0)

    # --- test 1: bidirectional, 2 layers, concat over layers ---
    B, T, D_in, H, nlayers = 2, 8, 32, 32, 2
    key, kx = jax.random.split(key)
    x = jax.random.normal(kx, (B, T, D_in), dtype=jnp.float32)
    params, key = make_gru_params(key, D_in, H, nlayers, bidir=True)

    out = encoder_rnn_forward(x, params, concat=True, return_last=False)
    out = jax.block_until_ready(out)
    ref = encoder_rnn_reference(x, params, concat=True, return_last=False)
    assert out.shape == (B, T, nlayers * 2 * H), out.shape
    assert jnp.allclose(out, ref, atol=1e-3, rtol=1e-3), (
        "mismatch vs reference (outputs)", float(jnp.max(jnp.abs(out - ref))))

    out_last = encoder_rnn_forward(x, params, concat=False, return_last=True)
    out_last = jax.block_until_ready(out_last)
    ref_last = encoder_rnn_reference(x, params, concat=False, return_last=True)
    assert out_last.shape == (B, 2 * H), out_last.shape
    assert jnp.allclose(out_last, ref_last, atol=1e-3, rtol=1e-3), (
        "mismatch vs reference (hidden)", float(jnp.max(jnp.abs(out_last - ref_last))))

    # --- test 2: unidirectional, 8-aligned batch tile path (grid > 1) ---
    B2, T2, D2, H2 = 16, 6, 16, 32
    key, kx2 = jax.random.split(key)
    x2 = jax.random.normal(kx2, (B2, T2, D2), dtype=jnp.float32)
    params2, key = make_gru_params(key, D2, H2, 1, bidir=False)

    out2 = encoder_rnn_forward(x2, params2, concat=False, return_last=False)
    out2 = jax.block_until_ready(out2)
    ref2 = encoder_rnn_reference(x2, params2, concat=False, return_last=False)
    assert out2.shape == (B2, T2, H2), out2.shape
    assert jnp.allclose(out2, ref2, atol=1e-3, rtol=1e-3), (
        "mismatch vs reference (unidir)", float(jnp.max(jnp.abs(out2 - ref2))))

    print("KERNEL_OK")
</pallas_src>

<mosaic_0001>
module attributes {stable_mosaic.version = 11 : i64} {
  func.func @_gru_layer_kernel(%arg0: i32, %arg1: memref<8x2x32xf32, #tpu.memory_space<vmem>>, %arg2: memref<32x192xf32, #tpu.memory_space<vmem>>, %arg3: memref<2x32x96xf32, #tpu.memory_space<vmem>>, %arg4: memref<2x192xf32, #tpu.memory_space<vmem>>, %arg5: memref<8x2x64xf32, #tpu.memory_space<vmem>>, %arg6: memref<2x64xf32, #tpu.memory_space<vmem>>, %arg7: memref<8x2x192xf32, #tpu.memory_space<vmem>>) attributes {dimension_semantics = [#tpu.dimension_semantics<parallel>], iteration_bounds = array<i64: 1>, scalar_prefetch = 0 : i64, scratch_operands = 1 : i64, tpu.core_type = #tpu.core_type<tc>, window_params = [{transform_indices = @transform_0, window_bounds = array<i64: 8, 2, 32>}, {pipeline_mode = #tpu.pipeline_mode<synchronous>, transform_indices = @transform_1, window_bounds = array<i64: 32, 192>}, {pipeline_mode = #tpu.pipeline_mode<synchronous>, transform_indices = @transform_2, window_bounds = array<i64: 2, 32, 96>}, {pipeline_mode = #tpu.pipeline_mode<synchronous>, transform_indices = @transform_3, window_bounds = array<i64: 2, 192>}, {transform_indices = @transform_4, window_bounds = array<i64: 8, 2, 64>}, {transform_indices = @transform_5, window_bounds = array<i64: 2, 64>}]} {
    %c0 = arith.constant 0 : index
    %c0_0 = arith.constant 0 : index
    %c0_1 = arith.constant 0 : index
    %0 = vector.load %arg1[%c0, %c0_0, %c0_1] : memref<8x2x32xf32, #tpu.memory_space<vmem>>, vector<8x2x32xf32>
    %1 = vector.shape_cast %0 : vector<8x2x32xf32> to vector<16x32xf32>
    %c0_2 = arith.constant 0 : index
    %c0_3 = arith.constant 0 : index
    %2 = vector.load %arg2[%c0_2, %c0_3] : memref<32x192xf32, #tpu.memory_space<vmem>>, vector<32x192xf32>
    %cst = arith.constant dense<0.000000e+00> : vector<16x192xf32>
    %3 = tpu.matmul %1, %2, %cst {dimension_numbers = #tpu.dot_dimension_numbers<[1], [0], [0], [1], [0, 0, 1, 1], [], []>} : vector<16x32xf32>, vector<32x192xf32>, vector<16x192xf32> -> vector<16x192xf32>
    %c0_4 = arith.constant 0 : index
    %c0_5 = arith.constant 0 : index
    %4 = vector.load %arg4[%c0_4, %c0_5] : memref<2x192xf32, #tpu.memory_space<vmem>>, vector<1x192xf32>
    %5 = vector.broadcast %4 : vector<1x192xf32> to vector<16x192xf32>
    %6 = arith.addf %3, %5 : vector<16x192xf32>
    %7 = vector.shape_cast %6 : vector<16x192xf32> to vector<8x2x192xf32>
    %c0_6 = arith.constant 0 : index
    %c0_7 = arith.constant 0 : index
    %c0_8 = arith.constant 0 : index
    %8 = vector.load %arg7[%c0_6, %c0_7, %c0_8] : memref<8x2x192xf32, #tpu.memory_space<vmem>>, vector<8x2x192xf32>
    tpu.vector_store %arg7[%c0_6, %c0_7, %c0_8], %7 {strides = array<i32>} : memref<8x2x192xf32, #tpu.memory_space<vmem>>, vector<8x2x192xf32>,
    %c0_9 = arith.constant 0 : index
    %c0_10 = arith.constant 0 : index
    %c0_11 = arith.constant 0 : index
    %9 = vector.load %arg3[%c0_9, %c0_10, %c0_11] : memref<2x32x96xf32, #tpu.memory_space<vmem>>, vector<1x32x96xf32>
    %10 = vector.shape_cast %9 : vector<1x32x96xf32> to vector<32x96xf32>
    %c1 = arith.constant 1 : index
    %c0_12 = arith.constant 0 : index
    %c0_13 = arith.constant 0 : index
    %11 = vector.load %arg3[%c1, %c0_12, %c0_13] : memref<2x32x96xf32, #tpu.memory_space<vmem>>, vector<1x32x96xf32>
    %12 = vector.shape_cast %11 : vector<1x32x96xf32> to vector<32x96xf32>
    %c1_14 = arith.constant 1 : index
    %c0_15 = arith.constant 0 : index
    %13 = vector.load %arg4[%c1_14, %c0_15] : memref<2x192xf32, #tpu.memory_space<vmem>>, vector<1x96xf32>
    %c1_16 = arith.constant 1 : index
    %c96 = arith.constant 96 : index
    %14 = vector.load %arg4[%c1_16, %c96] : memref<2x192xf32, #tpu.memory_space<vmem>>, vector<1x96xf32>
    %cst_17 = arith.constant 0.000000e+00 : f32
    %15 = vector.broadcast %cst_17 : f32 to vector<2x32xf32>
    %cst_18 = arith.constant 0.000000e+00 : f32
    %16 = vector.broadcast %cst_18 : f32 to vector<2x32xf32>
    %c0_i32 = arith.constant 0 : i32
    %17 = arith.index_cast %c0_i32 : i32 to index
    %c0_19 = arith.constant 0 : index
    %c0_20 = arith.constant 0 : index
    %18 = vector.load %arg7[%17, %c0_19, %c0_20] : memref<8x2x192xf32, #tpu.memory_space<vmem>>, vector<1x2x192xf32>
    %19 = vector.shape_cast %18 : vector<1x2x192xf32> to vector<2x192xf32>
    %20 = vector.extract_strided_slice %19 {offsets = [0, 0], sizes = [2, 96], strides = [1, 1]} : vector<2x192xf32> to vector<2x96xf32>
    %cst_21 = arith.constant dense<0.000000e+00> : vector<2x96xf32>
    %21 = tpu.matmul %15, %10, %cst_21 {dimension_numbers = #tpu.dot_dimension_numbers<[1], [0], [0], [1], [0, 0, 1, 1], [], []>} : vector<2x32xf32>, vector<32x96xf32>, vector<2x96xf32> -> vector<2x96xf32>
    %22 = vector.broadcast %13 : vector<1x96xf32> to vector<2x96xf32>
    %23 = arith.addf %21, %22 : vector<2x96xf32>
    %24 = vector.extract_strided_slice %20 {offsets = [0, 0], sizes = [2, 32], strides = [1, 1]} : vector<2x96xf32> to vector<2x32xf32>
    %25 = vector.extract_strided_slice %23 {offsets = [0, 0], sizes = [2, 32], strides = [1, 1]} : vector<2x96xf32> to vector<2x32xf32>
    %26 = arith.addf %24, %25 : vector<2x32xf32>
    %cst_22 = arith.constant 0.000000e+00 : f32
    %27 = vector.broadcast %cst_22 : f32 to vector<2x32xf32>
    %28 = arith.subf %27, %26 : vector<2x32xf32>
    %29 = math.exp %28 : vector<2x32xf32>
    %cst_23 = arith.constant 1.000000e+00 : f32
    %30 = vector.broadcast %cst_23 : f32 to vector<2x32xf32>
    %31 = arith.addf %30, %29 : vector<2x32xf32>
    %cst_24 = arith.constant 1.000000e+00 : f32
    %32 = vector.broadcast %cst_24 : f32 to vector<2x32xf32>
    %33 = arith.divf %32, %31 : vector<2x32xf32>
    %34 = vector.extract_strided_slice %20 {offsets = [0, 32], sizes = [2, 32], strides = [1, 1]} : vector<2x96xf32> to vector<2x32xf32>
    %35 = vector.extract_strided_slice %23 {offsets = [0, 32], sizes = [2, 32], strides = [1, 1]} : vector<2x96xf32> to vector<2x32xf32>
    %36 = arith.addf %34, %35 : vector<2x32xf32>
    %cst_25 = arith.constant 0.000000e+00 : f32
    %37 = vector.broadcast %cst_25 : f32 to vector<2x32xf32>
    %38 = arith.subf %37, %36 : vector<2x32xf32>
    %39 = math.exp %38 : vector<2x32xf32>
    %cst_26 = arith.constant 1.000000e+00 : f32
    %40 = vector.broadcast %cst_26 : f32 to vector<2x32xf32>
    %41 = arith.addf %40, %39 : vector<2x32xf32>
    %cst_27 = arith.constant 1.000000e+00 : f32
    %42 = vector.broadcast %cst_27 : f32 to vector<2x32xf32>
    %43 = arith.divf %42, %41 : vector<2x32xf32>
    %44 = vector.extract_strided_slice %20 {offsets = [0, 64], sizes = [2, 32], strides = [1, 1]} : vector<2x96xf32> to vector<2x32xf32>
    %45 = vector.extract_strided_slice %23 {offsets = [0, 64], sizes = [2, 32], strides = [1, 1]} : vector<2x96xf32> to vector<2x32xf32>
    %46 = arith.mulf %33, %45 : vector<2x32xf32>
    %47 = arith.addf %44, %46 : vector<2x32xf32>
    %48 = math.tanh %47 : vector<2x32xf32>
    %cst_28 = arith.constant 1.000000e+00 : f32
    %49 = vector.broadcast %cst_28 : f32 to vector<2x32xf32>
    %50 = arith.subf %49, %43 : vector<2x32xf32>
    %51 = arith.mulf %50, %48 : vector<2x32xf32>
    %52 = arith.mulf %43, %15 : vector<2x32xf32>
    %53 = arith.addf %51, %52 : vector<2x32xf32>
    %54 = arith.index_cast %c0_i32 : i32 to index
    %c0_29 = arith.constant 0 : index
    %c0_30 = arith.constant 0 : index
    %55 = vector.load %arg5[%54, %c0_29, %c0_30] : memref<8x2x64xf32, #tpu.memory_space<vmem>>, vector<1x2x32xf32>
    %56 = vector.shape_cast %55 : vector<1x2x32xf32> to vector<2x32xf32>
    %57 = vector.shape_cast %53 : vector<2x32xf32> to vector<1x2x32xf32>
    tpu.vector_store %arg5[%54, %c0_29, %c0_30], %57 {strides = array<i32>} : memref<8x2x64xf32, #tpu.memory_space<vmem>>, vector<1x2x32xf32>,
    %c7_i32 = arith.constant 7 : i32
    %58 = arith.subi %c7_i32, %c0_i32 : i32
    %59 = arith.index_cast %58 : i32 to index
    %c0_31 = arith.constant 0 : index
    %c0_32 = arith.constant 0 : index
    %60 = vector.load %arg7[%59, %c0_31, %c0_32] : memref<8x2x192xf32, #tpu.memory_space<vmem>>, vector<1x2x192xf32>
    %61 = vector.shape_cast %60 : vector<1x2x192xf32> to vector<2x192xf32>
    %62 = vector.extract_strided_slice %61 {offsets = [0, 96], sizes = [2, 96], strides = [1, 1]} : vector<2x192xf32> to vector<2x96xf32>
    %cst_33 = arith.constant dense<0.000000e+00> : vector<2x96xf32>
    %63 = tpu.matmul %16, %12, %cst_33 {dimension_numbers = #tpu.dot_dimension_numbers<[1], [0], [0], [1], [0, 0, 1, 1], [], []>} : vector<2x32xf32>, vector<32x96xf32>, vector<2x96xf32> -> vector<2x96xf32>
    %64 = vector.broadcast %14 : vector<1x96xf32> to vector<2x96xf32>
    %65 = arith.addf %63, %64 : vector<2x96xf32>
    %66 = vector.extract_strided_slice %62 {offsets = [0, 0], sizes = [2, 32], strides = [1, 1]} : vector<2x96xf32> to vector<2x32xf32>
    %67 = vector.extract_strided_slice %65 {offsets = [0, 0], sizes = [2, 32], strides = [1, 1]} : vector<2x96xf32> to vector<2x32xf32>
    %68 = arith.addf %66, %67 : vector<2x32xf32>
    %cst_34 = arith.constant 0.000000e+00 : f32
    %69 = vector.broadcast %cst_34 : f32 to vector<2x32xf32>
    %70 = arith.subf %69, %68 : vector<2x32xf32>
    %71 = math.exp %70 : vector<2x32xf32>
    %cst_35 = arith.constant 1.000000e+00 : f32
    %72 = vector.broadcast %cst_35 : f32 to vector<2x32xf32>
    %73 = arith.addf %72, %71 : vector<2x32xf32>
    %cst_36 = arith.constant 1.000000e+00 : f32
    %74 = vector.broadcast %cst_36 : f32 to vector<2x32xf32>
    %75 = arith.divf %74, %73 : vector<2x32xf32>
    %76 = vector.extract_strided_slice %62 {offsets = [0, 32], sizes = [2, 32], strides = [1, 1]} : vector<2x96xf32> to vector<2x32xf32>
    %77 = vector.extract_strided_slice %65 {offsets = [0, 32], sizes = [2, 32], strides = [1, 1]} : vector<2x96xf32> to vector<2x32xf32>
    %78 = arith.addf %76, %77 : vector<2x32xf32>
    %cst_37 = arith.constant 0.000000e+00 : f32
    %79 = vector.broadcast %cst_37 : f32 to vector<2x32xf32>
    %80 = arith.subf %79, %78 : vector<2x32xf32>
    %81 = math.exp %80 : vector<2x32xf32>
    %cst_38 = arith.constant 1.000000e+00 : f32
    %82 = vector.broadcast %cst_38 : f32 to vector<2x32xf32>
    %83 = arith.addf %82, %81 : vector<2x32xf32>
    %cst_39 = arith.constant 1.000000e+00 : f32
    %84 = vector.broadcast %cst_39 : f32 to vector<2x32xf32>
    %85 = arith.divf %84, %83 : vector<2x32xf32>
    %86 = vector.extract_strided_slice %62 {offsets = [0, 64], sizes = [2, 32], strides = [1, 1]} : vector<2x96xf32> to vector<2x32xf32>
    %87 = vector.extract_strided_slice %65 {offsets = [0, 64], sizes = [2, 32], strides = [1, 1]} : vector<2x96xf32> to vector<2x32xf32>
    %88 = arith.mulf %75, %87 : vector<2x32xf32>
    %89 = arith.addf %86, %88 : vector<2x32xf32>
    %90 = math.tanh %89 : vector<2x32xf32>
    %cst_40 = arith.constant 1.000000e+00 : f32
    %91 = vector.broadcast %cst_40 : f32 to vector<2x32xf32>
    %92 = arith.subf %91, %85 : vector<2x32xf32>
    %93 = arith.mulf %92, %90 : vector<2x32xf32>
    %94 = arith.mulf %85, %16 : vector<2x32xf32>
    %95 = arith.addf %93, %94 : vector<2x32xf32>
    %96 = arith.index_cast %58 : i32 to index
    %c0_41 = arith.constant 0 : index
    %c32 = arith.constant 32 : index
    %97 = vector.load %arg5[%96, %c0_41, %c32] : memref<8x2x64xf32, #tpu.memory_space<vmem>>, vector<1x2x32xf32>
    %98 = vector.shape_cast %97 : vector<1x2x32xf32> to vector<2x32xf32>
    %99 = vector.shape_cast %95 : vector<2x32xf32> to vector<1x2x32xf32>
    tpu.vector_store %arg5[%96, %c0_41, %c32], %99 {strides = array<i32>} : memref<8x2x64xf32, #tpu.memory_space<vmem>>, vector<1x2x32xf32>,
    %c1_i32 = arith.constant 1 : i32
    %100 = arith.index_cast %c1_i32 : i32 to index
    %c0_42 = arith.constant 0 : index
    %c0_43 = arith.constant 0 : index
    %101 = vector.load %arg7[%100, %c0_42, %c0_43] : memref<8x2x192xf32, #tpu.memory_space<vmem>>, vector<1x2x192xf32>
    %102 = vector.shape_cast %101 : vector<1x2x192xf32> to vector<2x192xf32>
    %103 = vector.extract_strided_slice %102 {offsets = [0, 0], sizes = [2, 96], strides = [1, 1]} : vector<2x192xf32> to vector<2x96xf32>
    %cst_44 = arith.constant dense<0.000000e+00> : vector<2x96xf32>
    %104 = tpu.matmul %53, %10, %cst_44 {dimension_numbers = #tpu.dot_dimension_numbers<[1], [0], [0], [1], [0, 0, 1, 1], [], []>} : vector<2x32xf32>, vector<32x96xf32>, vector<2x96xf32> -> vector<2x96xf32>
    %105 = vector.broadcast %13 : vector<1x96xf32> to vector<2x96xf32>
    %106 = arith.addf %104, %105 : vector<2x96xf32>
    %107 = vector.extract_strided_slice %103 {offsets = [0, 0], sizes = [2, 32], strides = [1, 1]} : vector<2x96xf32> to vector<2x32xf32>
    %108 = vector.extract_strided_slice %106 {offsets = [0, 0], sizes = [2, 32], strides = [1, 1]} : vector<2x96xf32> to vector<2x32xf32>
    %109 = arith.addf %107, %108 : vector<2x32xf32>
    %cst_45 = arith.constant 0.000000e+00 : f32
    %110 = vector.broadcast %cst_45 : f32 to vector<2x32xf32>
    %111 = arith.subf %110, %109 : vector<2x32xf32>
    %112 = math.exp %111 : vector<2x32xf32>
    %cst_46 = arith.constant 1.000000e+00 : f32
    %113 = vector.broadcast %cst_46 : f32 to vector<2x32xf32>
    %114 = arith.addf %113, %112 : vector<2x32xf32>
    %cst_47 = arith.constant 1.000000e+00 : f32
    %115 = vector.broadcast %cst_47 : f32 to vector<2x32xf32>
    %116 = arith.divf %115, %114 : vector<2x32xf32>
    %117 = vector.extract_strided_slice %103 {offsets = [0, 32], sizes = [2, 32], strides = [1, 1]} : vector<2x96xf32> to vector<2x32xf32>
    %118 = vector.extract_strided_slice %106 {offsets = [0, 32], sizes = [2, 32], strides = [1, 1]} : vector<2x96xf32> to vector<2x32xf32>
    %119 = arith.addf %117, %118 : vector<2x32xf32>
    %cst_48 = arith.constant 0.000000e+00 : f32
    %120 = vector.broadcast %cst_48 : f32 to vector<2x32xf32>
    %121 = arith.subf %120, %119 : vector<2x32xf32>
    %122 = math.exp %121 : vector<2x32xf32>
    %cst_49 = arith.constant 1.000000e+00 : f32
    %123 = vector.broadcast %cst_49 : f32 to vector<2x32xf32>
    %124 = arith.addf %123, %122 : vector<2x32xf32>
    %cst_50 = arith.constant 1.000000e+00 : f32
    %125 = vector.broadcast %cst_50 : f32 to vector<2x32xf32>
    %126 = arith.divf %125, %124 : vector<2x32xf32>
    %127 = vector.extract_strided_slice %103 {offsets = [0, 64], sizes = [2, 32], strides = [1, 1]} : vector<2x96xf32> to vector<2x32xf32>
    %128 = vector.extract_strided_slice %106 {offsets = [0, 64], sizes = [2, 32], strides = [1, 1]} : vector<2x96xf32> to vector<2x32xf32>
    %129 = arith.mulf %116, %128 : vector<2x32xf32>
    %130 = arith.addf %127, %129 : vector<2x32xf32>
    %131 = math.tanh %130 : vector<2x32xf32>
    %cst_51 = arith.constant 1.000000e+00 : f32
    %132 = vector.broadcast %cst_51 : f32 to vector<2x32xf32>
    %133 = arith.subf %132, %126 : vector<2x32xf32>
    %134 = arith.mulf %133, %131 : vector<2x32xf32>
    %135 = arith.mulf %126, %53 : vector<2x32xf32>
    %136 = arith.addf %134, %135 : vector<2x32xf32>
    %137 = arith.index_cast %c1_i32 : i32 to index
    %c0_52 = arith.constant 0 : index
    %c0_53 = arith.constant 0 : index
    %138 = vector.load %arg5[%137, %c0_52, %c0_53] : memref<8x2x64xf32, #tpu.memory_space<vmem>>, vector<1x2x32xf32>
    %139 = vector.shape_cast %138 : vector<1x2x32xf32> to vector<2x32xf32>
    %140 = vector.shape_cast %136 : vector<2x32xf32> to vector<1x2x32xf32>
    tpu.vector_store %arg5[%137, %c0_52, %c0_53], %140 {strides = array<i32>} : memref<8x2x64xf32, #tpu.memory_space<vmem>>, vector<1x2x32xf32>,
    %c7_i32_54 = arith.constant 7 : i32
    %141 = arith.subi %c7_i32_54, %c1_i32 : i32
    %142 = arith.index_cast %141 : i32 to index
    %c0_55 = arith.constant 0 : index
    %c0_56 = arith.constant 0 : index
    %143 = vector.load %arg7[%142, %c0_55, %c0_56] : memref<8x2x192xf32, #tpu.memory_space<vmem>>, vector<1x2x192xf32>
    %144 = vector.shape_cast %143 : vector<1x2x192xf32> to vector<2x192xf32>
    %145 = vector.extract_strided_slice %144 {offsets = [0, 96], sizes = [2, 96], strides = [1, 1]} : vector<2x192xf32> to vector<2x96xf32>
    %cst_57 = arith.constant dense<0.000000e+00> : vector<2x96xf32>
    %146 = tpu.matmul %95, %12, %cst_57 {dimension_numbers = #tpu.dot_dimension_numbers<[1], [0], [0], [1], [0, 0, 1, 1], [], []>} : vector<2x32xf32>, vector<32x96xf32>, vector<2x96xf32> -> vector<2x96xf32>
    %147 = vector.broadcast %14 : vector<1x96xf32> to vector<2x96xf32>
    %148 = arith.addf %146, %147 : vector<2x96xf32>
    %149 = vector.extract_strided_slice %145 {offsets = [0, 0], sizes = [2, 32], strides = [1, 1]} : vector<2x96xf32> to vector<2x32xf32>
    %150 = vector.extract_strided_slice %148 {offsets = [0, 0], sizes = [2, 32], strides = [1, 1]} : vector<2x96xf32> to vector<2x32xf32>
    %151 = arith.addf %149, %150 : vector<2x32xf32>
    %cst_58 = arith.constant 0.000000e+00 : f32
    %152 = vector.broadcast %cst_58 : f32 to vector<2x32xf32>
    %153 = arith.subf %152, %151 : vector<2x32xf32>
    %154 = math.exp %153 : vector<2x32xf32>
    %cst_59 = arith.constant 1.000000e+00 : f32
    %155 = vector.broadcast %cst_59 : f32 to vector<2x32xf32>
    %156 = arith.addf %155, %154 : vector<2x32xf32>
    %cst_60 = arith.constant 1.000000e+00 : f32
    %157 = vector.broadcast %cst_60 : f32 to vector<2x32xf32>
    %158 = arith.divf %157, %156 : vector<2x32xf32>
    %159 = vector.extract_strided_slice %145 {offsets = [0, 32], sizes = [2, 32], strides = [1, 1]} : vector<2x96xf32> to vector<2x32xf32>
    %160 = vector.extract_strided_slice %148 {offsets = [0, 32], sizes = [2, 32], strides = [1, 1]} : vector<2x96xf32> to vector<2x32xf32>
    %161 = arith.addf %159, %160 : vector<2x32xf32>
    %cst_61 = arith.constant 0.000000e+00 : f32
    %162 = vector.broadcast %cst_61 : f32 to vector<2x32xf32>
    %163 = arith.subf %162, %161 : vector<2x32xf32>
    %164 = math.exp %163 : vector<2x32xf32>
    %cst_62 = arith.constant 1.000000e+00 : f32
    %165 = vector.broadcast %cst_62 : f32 to vector<2x32xf32>
    %166 = arith.addf %165, %164 : vector<2x32xf32>
    %cst_63 = arith.constant 1.000000e+00 : f32
    %167 = vector.broadcast %cst_63 : f32 to vector<2x32xf32>
    %168 = arith.divf %167, %166 : vector<2x32xf32>
    %169 = vector.extract_strided_slice %145 {offsets = [0, 64], sizes = [2, 32], strides = [1, 1]} : vector<2x96xf32> to vector<2x32xf32>
    %170 = vector.extract_strided_slice %148 {offsets = [0, 64], sizes = [2, 32], strides = [1, 1]} : vector<2x96xf32> to vector<2x32xf32>
    %171 = arith.mulf %158, %170 : vector<2x32xf32>
    %172 = arith.addf %169, %171 : vector<2x32xf32>
    %173 = math.tanh %172 : vector<2x32xf32>
    %cst_64 = arith.constant 1.000000e+00 : f32
    %174 = vector.broadcast %cst_64 : f32 to vector<2x32xf32>
    %175 = arith.subf %174, %168 : vector<2x32xf32>
    %176 = arith.mulf %175, %173 : vector<2x32xf32>
    %177 = arith.mulf %168, %95 : vector<2x32xf32>
    %178 = arith.addf %176, %177 : vector<2x32xf32>
    %179 = arith.index_cast %141 : i32 to index
    %c0_65 = arith.constant 0 : index
    %c32_66 = arith.constant 32 : index
    %180 = vector.load %arg5[%179, %c0_65, %c32_66] : memref<8x2x64xf32, #tpu.memory_space<vmem>>, vector<1x2x32xf32>
    %181 = vector.shape_cast %180 : vector<1x2x32xf32> to vector<2x32xf32>
    %182 = vector.shape_cast %178 : vector<2x32xf32> to vector<1x2x32xf32>
    tpu.vector_store %arg5[%179, %c0_65, %c32_66], %182 {strides = array<i32>} : memref<8x2x64xf32, #tpu.memory_space<vmem>>, vector<1x2x32xf32>,
    %c2_i32 = arith.constant 2 : i32
    %183 = arith.index_cast %c2_i32 : i32 to index
    %c0_67 = arith.constant 0 : index
    %c0_68 = arith.constant 0 : index
    %184 = vector.load %arg7[%183, %c0_67, %c0_68] : memref<8x2x192xf32, #tpu.memory_space<vmem>>, vector<1x2x192xf32>
    %185 = vector.shape_cast %184 : vector<1x2x192xf32> to vector<2x192xf32>
    %186 = vector.extract_strided_slice %185 {offsets = [0, 0], sizes = [2, 96], strides = [1, 1]} : vector<2x192xf32> to vector<2x96xf32>
    %cst_69 = arith.constant dense<0.000000e+00> : vector<2x96xf32>
    %187 = tpu.matmul %136, %10, %cst_69 {dimension_numbers = #tpu.dot_dimension_numbers<[1], [0], [0], [1], [0, 0, 1, 1], [], []>} : vector<2x32xf32>, vector<32x96xf32>, vector<2x96xf32> -> vector<2x96xf32>
    %188 = vector.broadcast %13 : vector<1x96xf32> to vector<2x96xf32>
    %189 = arith.addf %187, %188 : vector<2x96xf32>
    %190 = vector.extract_strided_slice %186 {offsets = [0, 0], sizes = [2, 32], strides = [1, 1]} : vector<2x96xf32> to vector<2x32xf32>
    %191 = vector.extract_strided_slice %189 {offsets = [0, 0], sizes = [2, 32], strides = [1, 1]} : vector<2x96xf32> to vector<2x32xf32>
    %192 = arith.addf %190, %191 : vector<2x32xf32>
    %cst_70 = arith.constant 0.000000e+00 : f32
    %193 = vector.broadcast %cst_70 : f32 to vector<2x32xf32>
    %194 = arith.subf %193, %192 : vector<2x32xf32>
    %195 = math.exp %194 : vector<2x32xf32>
    %cst_71 = arith.constant 1.000000e+00 : f32
    %196 = vector.broadcast %cst_71 : f32 to vector<2x32xf32>
    %197 = arith.addf %196, %195 : vector<2x32xf32>
    %cst_72 = arith.constant 1.000000e+00 : f32
    %198 = vector.broadcast %cst_72 : f32 to vector<2x32xf32>
    %199 = arith.divf %198, %197 : vector<2x32xf32>
    %200 = vector.extract_strided_slice %186 {offsets = [0, 32], sizes = [2, 32], strides = [1, 1]} : vector<2x96xf32> to vector<2x32xf32>
    %201 = vector.extract_strided_slice %189 {offsets = [0, 32], sizes = [2, 32], strides = [1, 1]} : vector<2x96xf32> to vector<2x32xf32>
    %202 = arith.addf %200, %201 : vector<2x32xf32>
    %cst_73 = arith.constant 0.000000e+00 : f32
    %203 = vector.broadcast %cst_73 : f32 to vector<2x32xf32>
    %204 = arith.subf %203, %202 : vector<2x32xf32>
    %205 = math.exp %204 : vector<2x32xf32>
    %cst_74 = arith.constant 1.000000e+00 : f32
    %206 = vector.broadcast %cst_74 : f32 to vector<2x32xf32>
    %207 = arith.addf %206, %205 : vector<2x32xf32>
    %cst_75 = arith.constant 1.000000e+00 : f32
    %208 = vector.broadcast %cst_75 : f32 to vector<2x32xf32>
    %209 = arith.divf %208, %207 : vector<2x32xf32>
    %210 = vector.extract_strided_slice %186 {offsets = [0, 64], sizes = [2, 32], strides = [1, 1]} : vector<2x96xf32> to vector<2x32xf32>
    %211 = vector.extract_strided_slice %189 {offsets = [0, 64], sizes = [2, 32], strides = [1, 1]} : vector<2x96xf32> to vector<2x32xf32>
    %212 = arith.mulf %199, %211 : vector<2x32xf32>
    %213 = arith.addf %210, %212 : vector<2x32xf32>
    %214 = math.tanh %213 : vector<2x32xf32>
    %cst_76 = arith.constant 1.000000e+00 : f32
    %215 = vector.broadcast %cst_76 : f32 to vector<2x32xf32>
    %216 = arith.subf %215, %209 : vector<2x32xf32>
    %217 = arith.mulf %216, %214 : vector<2x32xf32>
    %218 = arith.mulf %209, %136 : vector<2x32xf32>
    %219 = arith.addf %217, %218 : vector<2x32xf32>
    %220 = arith.index_cast %c2_i32 : i32 to index
    %c0_77 = arith.constant 0 : index
    %c0_78 = arith.constant 0 : index
    %221 = vector.load %arg5[%220, %c0_77, %c0_78] : memref<8x2x64xf32, #tpu.memory_space<vmem>>, vector<1x2x32xf32>
    %222 = vector.shape_cast %221 : vector<1x2x32xf32> to vector<2x32xf32>
    %223 = vector.shape_cast %219 : vector<2x32xf32> to vector<1x2x32xf32>
    tpu.vector_store %arg5[%220, %c0_77, %c0_78], %223 {strides = array<i32>} : memref<8x2x64xf32, #tpu.memory_space<vmem>>, vector<1x2x32xf32>,
    %c7_i32_79 = arith.constant 7 : i32
    %224 = arith.subi %c7_i32_79, %c2_i32 : i32
    %225 = arith.index_cast %224 : i32 to index
    %c0_80 = arith.constant 0 : index
    %c0_81 = arith.constant 0 : index
    %226 = vector.load %arg7[%225, %c0_80, %c0_81] : memref<8x2x192xf32, #tpu.memory_space<vmem>>, vector<1x2x192xf32>
    %227 = vector.shape_cast %226 : vector<1x2x192xf32> to vector<2x192xf32>
    %228 = vector.extract_strided_slice %227 {offsets = [0, 96], sizes = [2, 96], strides = [1, 1]} : vector<2x192xf32> to vector<2x96xf32>
    %cst_82 = arith.constant dense<0.000000e+00> : vector<2x96xf32>
    %229 = tpu.matmul %178, %12, %cst_82 {dimension_numbers = #tpu.dot_dimension_numbers<[1], [0], [0], [1], [0, 0, 1, 1], [], []>} : vector<2x32xf32>, vector<32x96xf32>, vector<2x96xf32> -> vector<2x96xf32>
    %230 = vector.broadcast %14 : vector<1x96xf32> to vector<2x96xf32>
    %231 = arith.addf %229, %230 : vector<2x96xf32>
    %232 = vector.extract_strided_slice %228 {offsets = [0, 0], sizes = [2, 32], strides = [1, 1]} : vector<2x96xf32> to vector<2x32xf32>
    %233 = vector.extract_strided_slice %231 {offsets = [0, 0], sizes = [2, 32], strides = [1, 1]} : vector<2x96xf32> to vector<2x32xf32>
    %234 = arith.addf %232, %233 : vector<2x32xf32>
    %cst_83 = arith.constant 0.000000e+00 : f32
    %235 = vector.broadcast %cst_83 : f32 to vector<2x32xf32>
    %236 = arith.subf %235, %234 : vector<2x32xf32>
    %237 = math.exp %236 : vector<2x32xf32>
    %cst_84 = arith.constant 1.000000e+00 : f32
    %238 = vector.broadcast %cst_84 : f32 to vector<2x32xf32>
    %239 = arith.addf %238, %237 : vector<2x32xf32>
    %cst_85 = arith.constant 1.000000e+00 : f32
    %240 = vector.broadcast %cst_85 : f32 to vector<2x32xf32>
    %241 = arith.divf %240, %239 : vector<2x32xf32>
    %242 = vector.extract_strided_slice %228 {offsets = [0, 32], sizes = [2, 32], strides = [1, 1]} : vector<2x96xf32> to vector<2x32xf32>
    %243 = vector.extract_strided_slice %231 {offsets = [0, 32], sizes = [2, 32], strides = [1, 1]} : vector<2x96xf32> to vector<2x32xf32>
    %244 = arith.addf %242, %243 : vector<2x32xf32>
    %cst_86 = arith.constant 0.000000e+00 : f32
    %245 = vector.broadcast %cst_86 : f32 to vector<2x32xf32>
    %246 = arith.subf %245, %244 : vector<2x32xf32>
    %247 = math.exp %246 : vector<2x32xf32>
    %cst_87 = arith.constant 1.000000e+00 : f32
    %248 = vector.broadcast %cst_87 : f32 to vector<2x32xf32>
    %249 = arith.addf %248, %247 : vector<2x32xf32>
    %cst_88 = arith.constant 1.000000e+00 : f32
    %250 = vector.broadcast %cst_88 : f32 to vector<2x32xf32>
    %251 = arith.divf %250, %249 : vector<2x32xf32>
    %252 = vector.extract_strided_slice %228 {offsets = [0, 64], sizes = [2, 32], strides = [1, 1]} : vector<2x96xf32> to vector<2x32xf32>
    %253 = vector.extract_strided_slice %231 {offsets = [0, 64], sizes = [2, 32], strides = [1, 1]} : vector<2x96xf32> to vector<2x32xf32>
    %254 = arith.mulf %241, %253 : vector<2x32xf32>
    %255 = arith.addf %252, %254 : vector<2x32xf32>
    %256 = math.tanh %255 : vector<2x32xf32>
    %cst_89 = arith.constant 1.000000e+00 : f32
    %257 = vector.broadcast %cst_89 : f32 to vector<2x32xf32>
    %258 = arith.subf %257, %251 : vector<2x32xf32>
    %259 = arith.mulf %258, %256 : vector<2x32xf32>
    %260 = arith.mulf %251, %178 : vector<2x32xf32>
    %261 = arith.addf %259, %260 : vector<2x32xf32>
    %262 = arith.index_cast %224 : i32 to index
    %c0_90 = arith.constant 0 : index
    %c32_91 = arith.constant 32 : index
    %263 = vector.load %arg5[%262, %c0_90, %c32_91] : memref<8x2x64xf32, #tpu.memory_space<vmem>>, vector<1x2x32xf32>
    %264 = vector.shape_cast %263 : vector<1x2x32xf32> to vector<2x32xf32>
    %265 = vector.shape_cast %261 : vector<2x32xf32> to vector<1x2x32xf32>
    tpu.vector_store %arg5[%262, %c0_90, %c32_91], %265 {strides = array<i32>} : memref<8x2x64xf32, #tpu.memory_space<vmem>>, vector<1x2x32xf32>,
    %c3_i32 = arith.constant 3 : i32
    %266 = arith.index_cast %c3_i32 : i32 to index
    %c0_92 = arith.constant 0 : index
    %c0_93 = arith.constant 0 : index
    %267 = vector.load %arg7[%266, %c0_92, %c0_93] : memref<8x2x192xf32, #tpu.memory_space<vmem>>, vector<1x2x192xf32>
    %268 = vector.shape_cast %267 : vector<1x2x192xf32> to vector<2x192xf32>
    %269 = vector.extract_strided_slice %268 {offsets = [0, 0], sizes = [2, 96], strides = [1, 1]} : vector<2x192xf32> to vector<2x96xf32>
    %cst_94 = arith.constant dense<0.000000e+00> : vector<2x96xf32>
    %270 = tpu.matmul %219, %10, %cst_94 {dimension_numbers = #tpu.dot_dimension_numbers<[1], [0], [0], [1], [0, 0, 1, 1], [], []>} : vector<2x32xf32>, vector<32x96xf32>, vector<2x96xf32> -> vector<2x96xf32>
    %271 = vector.broadcast %13 : vector<1x96xf32> to vector<2x96xf32>
    %272 = arith.addf %270, %271 : vector<2x96xf32>
    %273 = vector.extract_strided_slice %269 {offsets = [0, 0], sizes = [2, 32], strides = [1, 1]} : vector<2x96xf32> to vector<2x32xf32>
    %274 = vector.extract_strided_slice %272 {offsets = [0, 0], sizes = [2, 32], strides = [1, 1]} : vector<2x96xf32> to vector<2x32xf32>
    %275 = arith.addf %273, %274 : vector<2x32xf32>
    %cst_95 = arith.constant 0.000000e+00 : f32
    %276 = vector.broadcast %cst_95 : f32 to vector<2x32xf32>
    %277 = arith.subf %276, %275 : vector<2x32xf32>
    %278 = math.exp %277 : vector<2x32xf32>
    %cst_96 = arith.constant 1.000000e+00 : f32
    %279 = vector.broadcast %cst_96 : f32 to vector<2x32xf32>
    %280 = arith.addf %279, %278 : vector<2x32xf32>
    %cst_97 = arith.constant 1.000000e+00 : f32
    %281 = vector.broadcast %cst_97 : f32 to vector<2x32xf32>
    %282 = arith.divf %281, %280 : vector<2x32xf32>
    %283 = vector.extract_strided_slice %269 {offsets = [0, 32], sizes = [2, 32], strides = [1, 1]} : vector<2x96xf32> to vector<2x32xf32>
    %284 = vector.extract_strided_slice %272 {offsets = [0, 32], sizes = [2, 32], strides = [1, 1]} : vector<2x96xf32> to vector<2x32xf32>
    %285 = arith.addf %283, %284 : vector<2x32xf32>
    %cst_98 = arith.constant 0.000000e+00 : f32
    %286 = vector.broadcast %cst_98 : f32 to vector<2x32xf32>
    %287 = arith.subf %286, %285 : vector<2x32xf32>
    %288 = math.exp %287 : vector<2x32xf32>
    %cst_99 = arith.constant 1.000000e+00 : f32
    %289 = vector.broadcast %cst_99 : f32 to vector<2x32xf32>
    %290 = arith.addf %289, %288 : vector<2x32xf32>
    %cst_100 = arith.constant 1.000000e+00 : f32
    %291 = vector.broadcast %cst_100 : f32 to vector<2x32xf32>
    %292 = arith.divf %291, %290 : vector<2x32xf32>
    %293 = vector.extract_strided_slice %269 {offsets = [0, 64], sizes = [2, 32], strides = [1, 1]} : vector<2x96xf32> to vector<2x32xf32>
    %294 = vector.extract_strided_slice %272 {offsets = [0, 64], sizes = [2, 32], strides = [1, 1]} : vector<2x96xf32> to vector<2x32xf32>
    %295 = arith.mulf %282, %294 : vector<2x32xf32>
    %296 = arith.addf %293, %295 : vector<2x32xf32>
    %297 = math.tanh %296 : vector<2x32xf32>
    %cst_101 = arith.constant 1.000000e+00 : f32
    %298 = vector.broadcast %cst_101 : f32 to vector<2x32xf32>
    %299 = arith.subf %298, %292 : vector<2x32xf32>
    %300 = arith.mulf %299, %297 : vector<2x32xf32>
    %301 = arith.mulf %292, %219 : vector<2x32xf32>
    %302 = arith.addf %300, %301 : vector<2x32xf32>
    %303 = arith.index_cast %c3_i32 : i32 to index
    %c0_102 = arith.constant 0 : index
    %c0_103 = arith.constant 0 : index
    %304 = vector.load %arg5[%303, %c0_102, %c0_103] : memref<8x2x64xf32, #tpu.memory_space<vmem>>, vector<1x2x32xf32>
    %305 = vector.shape_cast %304 : vector<1x2x32xf32> to vector<2x32xf32>
    %306 = vector.shape_cast %302 : vector<2x32xf32> to vector<1x2x32xf32>
    tpu.vector_store %arg5[%303, %c0_102, %c0_103], %306 {strides = array<i32>} : memref<8x2x64xf32, #tpu.memory_space<vmem>>, vector<1x2x32xf32>,
    %c7_i32_104 = arith.constant 7 : i32
    %307 = arith.subi %c7_i32_104, %c3_i32 : i32
    %308 = arith.index_cast %307 : i32 to index
    %c0_105 = arith.constant 0 : index
    %c0_106 = arith.constant 0 : index
    %309 = vector.load %arg7[%308, %c0_105, %c0_106] : memref<8x2x192xf32, #tpu.memory_space<vmem>>, vector<1x2x192xf32>
    %310 = vector.shape_cast %309 : vector<1x2x192xf32> to vector<2x192xf32>
    %311 = vector.extract_strided_slice %310 {offsets = [0, 96], sizes = [2, 96], strides = [1, 1]} : vector<2x192xf32> to vector<2x96xf32>
    %cst_107 = arith.constant dense<0.000000e+00> : vector<2x96xf32>
    %312 = tpu.matmul %261, %12, %cst_107 {dimension_numbers = #tpu.dot_dimension_numbers<[1], [0], [0], [1], [0, 0, 1, 1], [], []>} : vector<2x32xf32>, vector<32x96xf32>, vector<2x96xf32> -> vector<2x96xf32>
    %313 = vector.broadcast %14 : vector<1x96xf32> to vector<2x96xf32>
    %314 = arith.addf %312, %313 : vector<2x96xf32>
    %315 = vector.extract_strided_slice %311 {offsets = [0, 0], sizes = [2, 32], strides = [1, 1]} : vector<2x96xf32> to vector<2x32xf32>
    %316 = vector.extract_strided_slice %314 {offsets = [0, 0], sizes = [2, 32], strides = [1, 1]} : vector<2x96xf32> to vector<2x32xf32>
    %317 = arith.addf %315, %316 : vector<2x32xf32>
    %cst_108 = arith.constant 0.000000e+00 : f32
    %318 = vector.broadcast %cst_108 : f32 to vector<2x32xf32>
    %319 = arith.subf %318, %317 : vector<2x32xf32>
    %320 = math.exp %319 : vector<2x32xf32>
    %cst_109 = arith.constant 1.000000e+00 : f32
    %321 = vector.broadcast %cst_109 : f32 to vector<2x32xf32>
    %322 = arith.addf %321, %320 : vector<2x32xf32>
    %cst_110 = arith.constant 1.000000e+00 : f32
    %323 = vector.broadcast %cst_110 : f32 to vector<2x32xf32>
    %324 = arith.divf %323, %322 : vector<2x32xf32>
    %325 = vector.extract_strided_slice %311 {offsets = [0, 32], sizes = [2, 32], strides = [1, 1]} : vector<2x96xf32> to vector<2x32xf32>
    %326 = vector.extract_strided_slice %314 {offsets = [0, 32], sizes = [2, 32], strides = [1, 1]} : vector<2x96xf32> to vector<2x32xf32>
    %327 = arith.addf %325, %326 : vector<2x32xf32>
    %cst_111 = arith.constant 0.000000e+00 : f32
    %328 = vector.broadcast %cst_111 : f32 to vector<2x32xf32>
    %329 = arith.subf %328, %327 : vector<2x32xf32>
    %330 = math.exp %329 : vector<2x32xf32>
    %cst_112 = arith.constant 1.000000e+00 : f32
    %331 = vector.broadcast %cst_112 : f32 to vector<2x32xf32>
    %332 = arith.addf %331, %330 : vector<2x32xf32>
    %cst_113 = arith.constant 1.000000e+00 : f32
    %333 = vector.broadcast %cst_113 : f32 to vector<2x32xf32>
    %334 = arith.divf %333, %332 : vector<2x32xf32>
    %335 = vector.extract_strided_slice %311 {offsets = [0, 64], sizes = [2, 32], strides = [1, 1]} : vector<2x96xf32> to vector<2x32xf32>
    %336 = vector.extract_strided_slice %314 {offsets = [0, 64], sizes = [2, 32], strides = [1, 1]} : vector<2x96xf32> to vector<2x32xf32>
    %337 = arith.mulf %324, %336 : vector<2x32xf32>
    %338 = arith.addf %335, %337 : vector<2x32xf32>
    %339 = math.tanh %338 : vector<2x32xf32>
    %cst_114 = arith.constant 1.000000e+00 : f32
    %340 = vector.broadcast %cst_114 : f32 to vector<2x32xf32>
    %341 = arith.subf %340, %334 : vector<2x32xf32>
    %342 = arith.mulf %341, %339 : vector<2x32xf32>
    %343 = arith.mulf %334, %261 : vector<2x32xf32>
    %344 = arith.addf %342, %343 : vector<2x32xf32>
    %345 = arith.index_cast %307 : i32 to index
    %c0_115 = arith.constant 0 : index
    %c32_116 = arith.constant 32 : index
    %346 = vector.load %arg5[%345, %c0_115, %c32_116] : memref<8x2x64xf32, #tpu.memory_space<vmem>>, vector<1x2x32xf32>
    %347 = vector.shape_cast %346 : vector<1x2x32xf32> to vector<2x32xf32>
    %348 = vector.shape_cast %344 : vector<2x32xf32> to vector<1x2x32xf32>
    tpu.vector_store %arg5[%345, %c0_115, %c32_116], %348 {strides = array<i32>} : memref<8x2x64xf32, #tpu.memory_space<vmem>>, vector<1x2x32xf32>,
    %c4_i32 = arith.constant 4 : i32
    %349 = arith.index_cast %c4_i32 : i32 to index
    %c0_117 = arith.constant 0 : index
    %c0_118 = arith.constant 0 : index
    %350 = vector.load %arg7[%349, %c0_117, %c0_118] : memref<8x2x192xf32, #tpu.memory_space<vmem>>, vector<1x2x192xf32>
    %351 = vector.shape_cast %350 : vector<1x2x192xf32> to vector<2x192xf32>
    %352 = vector.extract_strided_slice %351 {offsets = [0, 0], sizes = [2, 96], strides = [1, 1]} : vector<2x192xf32> to vector<2x96xf32>
    %cst_119 = arith.constant dense<0.000000e+00> : vector<2x96xf32>
    %353 = tpu.matmul %302, %10, %cst_119 {dimension_numbers = #tpu.dot_dimension_numbers<[1], [0], [0], [1], [0, 0, 1, 1], [], []>} : vector<2x32xf32>, vector<32x96xf32>, vector<2x96xf32> -> vector<2x96xf32>
    %354 = vector.broadcast %13 : vector<1x96xf32> to vector<2x96xf32>
    %355 = arith.addf %353, %354 : vector<2x96xf32>
    %356 = vector.extract_strided_slice %352 {offsets = [0, 0], sizes = [2, 32], strides = [1, 1]} : vector<2x96xf32> to vector<2x32xf32>
    %357 = vector.extract_strided_slice %355 {offsets = [0, 0], sizes = [2, 32], strides = [1, 1]} : vector<2x96xf32> to vector<2x32xf32>
    %358 = arith.addf %356, %357 : vector<2x32xf32>
    %cst_120 = arith.constant 0.000000e+00 : f32
    %359 = vector.broadcast %cst_120 : f32 to vector<2x32xf32>
    %360 = arith.subf %359, %358 : vector<2x32xf32>
    %361 = math.exp %360 : vector<2x32xf32>
    %cst_121 = arith.constant 1.000000e+00 : f32
    %362 = vector.broadcast %cst_121 : f32 to vector<2x32xf32>
    %363 = arith.addf %362, %361 : vector<2x32xf32>
    %cst_122 = arith.constant 1.000000e+00 : f32
    %364 = vector.broadcast %cst_122 : f32 to vector<2x32xf32>
    %365 = arith.divf %364, %363 : vector<2x32xf32>
    %366 = vector.extract_strided_slice %352 {offsets = [0, 32], sizes = [2, 32], strides = [1, 1]} : vector<2x96xf32> to vector<2x32xf32>
    %367 = vector.extract_strided_slice %355 {offsets = [0, 32], sizes = [2, 32], strides = [1, 1]} : vector<2x96xf32> to vector<2x32xf32>
    %368 = arith.addf %366, %367 : vector<2x32xf32>
    %cst_123 = arith.constant 0.000000e+00 : f32
    %369 = vector.broadcast %cst_123 : f32 to vector<2x32xf32>
    %370 = arith.subf %369, %368 : vector<2x32xf32>
    %371 = math.exp %370 : vector<2x32xf32>
    %cst_124 = arith.constant 1.000000e+00 : f32
    %372 = vector.broadcast %cst_124 : f32 to vector<2x32xf32>
    %373 = arith.addf %372, %371 : vector<2x32xf32>
    %cst_125 = arith.constant 1.000000e+00 : f32
    %374 = vector.broadcast %cst_125 : f32 to vector<2x32xf32>
    %375 = arith.divf %374, %373 : vector<2x32xf32>
    %376 = vector.extract_strided_slice %352 {offsets = [0, 64], sizes = [2, 32], strides = [1, 1]} : vector<2x96xf32> to vector<2x32xf32>
    %377 = vector.extract_strided_slice %355 {offsets = [0, 64], sizes = [2, 32], strides = [1, 1]} : vector<2x96xf32> to vector<2x32xf32>
    %378 = arith.mulf %365, %377 : vector<2x32xf32>
    %379 = arith.addf %376, %378 : vector<2x32xf32>
    %380 = math.tanh %379 : vector<2x32xf32>
    %cst_126 = arith.constant 1.000000e+00 : f32
    %381 = vector.broadcast %cst_126 : f32 to vector<2x32xf32>
    %382 = arith.subf %381, %375 : vector<2x32xf32>
    %383 = arith.mulf %382, %380 : vector<2x32xf32>
    %384 = arith.mulf %375, %302 : vector<2x32xf32>
    %385 = arith.addf %383, %384 : vector<2x32xf32>
    %386 = arith.index_cast %c4_i32 : i32 to index
    %c0_127 = arith.constant 0 : index
    %c0_128 = arith.constant 0 : index
    %387 = vector.load %arg5[%386, %c0_127, %c0_128] : memref<8x2x64xf32, #tpu.memory_space<vmem>>, vector<1x2x32xf32>
    %388 = vector.shape_cast %387 : vector<1x2x32xf32> to vector<2x32xf32>
    %389 = vector.shape_cast %385 : vector<2x32xf32> to vector<1x2x32xf32>
    tpu.vector_store %arg5[%386, %c0_127, %c0_128], %389 {strides = array<i32>} : memref<8x2x64xf32, #tpu.memory_space<vmem>>, vector<1x2x32xf32>,
    %c7_i32_129 = arith.constant 7 : i32
    %390 = arith.subi %c7_i32_129, %c4_i32 : i32
    %391 = arith.index_cast %390 : i32 to index
    %c0_130 = arith.constant 0 : index
    %c0_131 = arith.constant 0 : index
    %392 = vector.load %arg7[%391, %c0_130, %c0_131] : memref<8x2x192xf32, #tpu.memory_space<vmem>>, vector<1x2x192xf32>
    %393 = vector.shape_cast %392 : vector<1x2x192xf32> to vector<2x192xf32>
    %394 = vector.extract_strided_slice %393 {offsets = [0, 96], sizes = [2, 96], strides = [1, 1]} : vector<2x192xf32> to vector<2x96xf32>
    %cst_132 = arith.constant dense<0.000000e+00> : vector<2x96xf32>
    %395 = tpu.matmul %344, %12, %cst_132 {dimension_numbers = #tpu.dot_dimension_numbers<[1], [0], [0], [1], [0, 0, 1, 1], [], []>} : vector<2x32xf32>, vector<32x96xf32>, vector<2x96xf32> -> vector<2x96xf32>
    %396 = vector.broadcast %14 : vector<1x96xf32> to vector<2x96xf32>
    %397 = arith.addf %395, %396 : vector<2x96xf32>
    %398 = vector.extract_strided_slice %394 {offsets = [0, 0], sizes = [2, 32], strides = [1, 1]} : vector<2x96xf32> to vector<2x32xf32>
    %399 = vector.extract_strided_slice %397 {offsets = [0, 0], sizes = [2, 32], strides = [1, 1]} : vector<2x96xf32> to vector<2x32xf32>
    %400 = arith.addf %398, %399 : vector<2x32xf32>
    %cst_133 = arith.constant 0.000000e+00 : f32
    %401 = vector.broadcast %cst_133 : f32 to vector<2x32xf32>
    %402 = arith.subf %401, %400 : vector<2x32xf32>
    %403 = math.exp %402 : vector<2x32xf32>
    %cst_134 = arith.constant 1.000000e+00 : f32
    %404 = vector.broadcast %cst_134 : f32 to vector<2x32xf32>
    %405 = arith.addf %404, %403 : vector<2x32xf32>
    %cst_135 = arith.constant 1.000000e+00 : f32
    %406 = vector.broadcast %cst_135 : f32 to vector<2x32xf32>
    %407 = arith.divf %406, %405 : vector<2x32xf32>
    %408 = vector.extract_strided_slice %394 {offsets = [0, 32], sizes = [2, 32], strides = [1, 1]} : vector<2x96xf32> to vector<2x32xf32>
    %409 = vector.extract_strided_slice %397 {offsets = [0, 32], sizes = [2, 32], strides = [1, 1]} : vector<2x96xf32> to vector<2x32xf32>
    %410 = arith.addf %408, %409 : vector<2x32xf32>
    %cst_136 = arith.constant 0.000000e+00 : f32
    %411 = vector.broadcast %cst_136 : f32 to vector<2x32xf32>
    %412 = arith.subf %411, %410 : vector<2x32xf32>
    %413 = math.exp %412 : vector<2x32xf32>
    %cst_137 = arith.constant 1.000000e+00 : f32
    %414 = vector.broadcast %cst_137 : f32 to vector<2x32xf32>
    %415 = arith.addf %414, %413 : vector<2x32xf32>
    %cst_138 = arith.constant 1.000000e+00 : f32
    %416 = vector.broadcast %cst_138 : f32 to vector<2x32xf32>
    %417 = arith.divf %416, %415 : vector<2x32xf32>
    %418 = vector.extract_strided_slice %394 {offsets = [0, 64], sizes = [2, 32], strides = [1, 1]} : vector<2x96xf32> to vector<2x32xf32>
    %419 = vector.extract_strided_slice %397 {offsets = [0, 64], sizes = [2, 32], strides = [1, 1]} : vector<2x96xf32> to vector<2x32xf32>
    %420 = arith.mulf %407, %419 : vector<2x32xf32>
    %421 = arith.addf %418, %420 : vector<2x32xf32>
    %422 = math.tanh %421 : vector<2x32xf32>
    %cst_139 = arith.constant 1.000000e+00 : f32
    %423 = vector.broadcast %cst_139 : f32 to vector<2x32xf32>
    %424 = arith.subf %423, %417 : vector<2x32xf32>
    %425 = arith.mulf %424, %422 : vector<2x32xf32>
    %426 = arith.mulf %417, %344 : vector<2x32xf32>
    %427 = arith.addf %425, %426 : vector<2x32xf32>
    %428 = arith.index_cast %390 : i32 to index
    %c0_140 = arith.constant 0 : index
    %c32_141 = arith.constant 32 : index
    %429 = vector.load %arg5[%428, %c0_140, %c32_141] : memref<8x2x64xf32, #tpu.memory_space<vmem>>, vector<1x2x32xf32>
    %430 = vector.shape_cast %429 : vector<1x2x32xf32> to vector<2x32xf32>
    %431 = vector.shape_cast %427 : vector<2x32xf32> to vector<1x2x32xf32>
    tpu.vector_store %arg5[%428, %c0_140, %c32_141], %431 {strides = array<i32>} : memref<8x2x64xf32, #tpu.memory_space<vmem>>, vector<1x2x32xf32>,
    %c5_i32 = arith.constant 5 : i32
    %432 = arith.index_cast %c5_i32 : i32 to index
    %c0_142 = arith.constant 0 : index
    %c0_143 = arith.constant 0 : index
    %433 = vector.load %arg7[%432, %c0_142, %c0_143] : memref<8x2x192xf32, #tpu.memory_space<vmem>>, vector<1x2x192xf32>
    %434 = vector.shape_cast %433 : vector<1x2x192xf32> to vector<2x192xf32>
    %435 = vector.extract_strided_slice %434 {offsets = [0, 0], sizes = [2, 96], strides = [1, 1]} : vector<2x192xf32> to vector<2x96xf32>
    %cst_144 = arith.constant dense<0.000000e+00> : vector<2x96xf32>
    %436 = tpu.matmul %385, %10, %cst_144 {dimension_numbers = #tpu.dot_dimension_numbers<[1], [0], [0], [1], [0, 0, 1, 1], [], []>} : vector<2x32xf32>, vector<32x96xf32>, vector<2x96xf32> -> vector<2x96xf32>
    %437 = vector.broadcast %13 : vector<1x96xf32> to vector<2x96xf32>
    %438 = arith.addf %436, %437 : vector<2x96xf32>
    %439 = vector.extract_strided_slice %435 {offsets = [0, 0], sizes = [2, 32], strides = [1, 1]} : vector<2x96xf32> to vector<2x32xf32>
    %440 = vector.extract_strided_slice %438 {offsets = [0, 0], sizes = [2, 32], strides = [1, 1]} : vector<2x96xf32> to vector<2x32xf32>
    %441 = arith.addf %439, %440 : vector<2x32xf32>
    %cst_145 = arith.constant 0.000000e+00 : f32
    %442 = vector.broadcast %cst_145 : f32 to vector<2x32xf32>
    %443 = arith.subf %442, %441 : vector<2x32xf32>
    %444 = math.exp %443 : vector<2x32xf32>
    %cst_146 = arith.constant 1.000000e+00 : f32
    %445 = vector.broadcast %cst_146 : f32 to vector<2x32xf32>
    %446 = arith.addf %445, %444 : vector<2x32xf32>
    %cst_147 = arith.constant 1.000000e+00 : f32
    %447 = vector.broadcast %cst_147 : f32 to vector<2x32xf32>
    %448 = arith.divf %447, %446 : vector<2x32xf32>
    %449 = vector.extract_strided_slice %435 {offsets = [0, 32], sizes = [2, 32], strides = [1, 1]} : vector<2x96xf32> to vector<2x32xf32>
    %450 = vector.extract_strided_slice %438 {offsets = [0, 32], sizes = [2, 32], strides = [1, 1]} : vector<2x96xf32> to vector<2x32xf32>
    %451 = arith.addf %449, %450 : vector<2x32xf32>
    %cst_148 = arith.constant 0.000000e+00 : f32
    %452 = vector.broadcast %cst_148 : f32 to vector<2x32xf32>
    %453 = arith.subf %452, %451 : vector<2x32xf32>
    %454 = math.exp %453 : vector<2x32xf32>
    %cst_149 = arith.constant 1.000000e+00 : f32
    %455 = vector.broadcast %cst_149 : f32 to vector<2x32xf32>
    %456 = arith.addf %455, %454 : vector<2x32xf32>
    %cst_150 = arith.constant 1.000000e+00 : f32
    %457 = vector.broadcast %cst_150 : f32 to vector<2x32xf32>
    %458 = arith.divf %457, %456 : vector<2x32xf32>
    %459 = vector.extract_strided_slice %435 {offsets = [0, 64], sizes = [2, 32], strides = [1, 1]} : vector<2x96xf32> to vector<2x32xf32>
    %460 = vector.extract_strided_slice %438 {offsets = [0, 64], sizes = [2, 32], strides = [1, 1]} : vector<2x96xf32> to vector<2x32xf32>
    %461 = arith.mulf %448, %460 : vector<2x32xf32>
    %462 = arith.addf %459, %461 : vector<2x32xf32>
    %463 = math.tanh %462 : vector<2x32xf32>
    %cst_151 = arith.constant 1.000000e+00 : f32
    %464 = vector.broadcast %cst_151 : f32 to vector<2x32xf32>
    %465 = arith.subf %464, %458 : vector<2x32xf32>
    %466 = arith.mulf %465, %463 : vector<2x32xf32>
    %467 = arith.mulf %458, %385 : vector<2x32xf32>
    %468 = arith.addf %466, %467 : vector<2x32xf32>
    %469 = arith.index_cast %c5_i32 : i32 to index
    %c0_152 = arith.constant 0 : index
    %c0_153 = arith.constant 0 : index
    %470 = vector.load %arg5[%469, %c0_152, %c0_153] : memref<8x2x64xf32, #tpu.memory_space<vmem>>, vector<1x2x32xf32>
    %471 = vector.shape_cast %470 : vector<1x2x32xf32> to vector<2x32xf32>
    %472 = vector.shape_cast %468 : vector<2x32xf32> to vector<1x2x32xf32>
    tpu.vector_store %arg5[%469, %c0_152, %c0_153], %472 {strides = array<i32>} : memref<8x2x64xf32, #tpu.memory_space<vmem>>, vector<1x2x32xf32>,
    %c7_i32_154 = arith.constant 7 : i32
    %473 = arith.subi %c7_i32_154, %c5_i32 : i32
    %474 = arith.index_cast %473 : i32 to index
    %c0_155 = arith.constant 0 : index
    %c0_156 = arith.constant 0 : index
    %475 = vector.load %arg7[%474, %c0_155, %c0_156] : memref<8x2x192xf32, #tpu.memory_space<vmem>>, vector<1x2x192xf32>
    %476 = vector.shape_cast %475 : vector<1x2x192xf32> to vector<2x192xf32>
    %477 = vector.extract_strided_slice %476 {offsets = [0, 96], sizes = [2, 96], strides = [1, 1]} : vector<2x192xf32> to vector<2x96xf32>
    %cst_157 = arith.constant dense<0.000000e+00> : vector<2x96xf32>
    %478 = tpu.matmul %427, %12, %cst_157 {dimension_numbers = #tpu.dot_dimension_numbers<[1], [0], [0], [1], [0, 0, 1, 1], [], []>} : vector<2x32xf32>, vector<32x96xf32>, vector<2x96xf32> -> vector<2x96xf32>
    %479 = vector.broadcast %14 : vector<1x96xf32> to vector<2x96xf32>
    %480 = arith.addf %478, %479 : vector<2x96xf32>
    %481 = vector.extract_strided_slice %477 {offsets = [0, 0], sizes = [2, 32], strides = [1, 1]} : vector<2x96xf32> to vector<2x32xf32>
    %482 = vector.extract_strided_slice %480 {offsets = [0, 0], sizes = [2, 32], strides = [1, 1]} : vector<2x96xf32> to vector<2x32xf32>
    %483 = arith.addf %481, %482 : vector<2x32xf32>
    %cst_158 = arith.constant 0.000000e+00 : f32
    %484 = vector.broadcast %cst_158 : f32 to vector<2x32xf32>
    %485 = arith.subf %484, %483 : vector<2x32xf32>
    %486 = math.exp %485 : vector<2x32xf32>
    %cst_159 = arith.constant 1.000000e+00 : f32
    %487 = vector.broadcast %cst_159 : f32 to vector<2x32xf32>
    %488 = arith.addf %487, %486 : vector<2x32xf32>
    %cst_160 = arith.constant 1.000000e+00 : f32
    %489 = vector.broadcast %cst_160 : f32 to vector<2x32xf32>
    %490 = arith.divf %489, %488 : vector<2x32xf32>
    %491 = vector.extract_strided_slice %477 {offsets = [0, 32], sizes = [2, 32], strides = [1, 1]} : vector<2x96xf32> to vector<2x32xf32>
    %492 = vector.extract_strided_slice %480 {offsets = [0, 32], sizes = [2, 32], strides = [1, 1]} : vector<2x96xf32> to vector<2x32xf32>
    %493 = arith.addf %491, %492 : vector<2x32xf32>
    %cst_161 = arith.constant 0.000000e+00 : f32
    %494 = vector.broadcast %cst_161 : f32 to vector<2x32xf32>
    %495 = arith.subf %494, %493 : vector<2x32xf32>
    %496 = math.exp %495 : vector<2x32xf32>
    %cst_162 = arith.constant 1.000000e+00 : f32
    %497 = vector.broadcast %cst_162 : f32 to vector<2x32xf32>
    %498 = arith.addf %497, %496 : vector<2x32xf32>
    %cst_163 = arith.constant 1.000000e+00 : f32
    %499 = vector.broadcast %cst_163 : f32 to vector<2x32xf32>
    %500 = arith.divf %499, %498 : vector<2x32xf32>
    %501 = vector.extract_strided_slice %477 {offsets = [0, 64], sizes = [2, 32], strides = [1, 1]} : vector<2x96xf32> to vector<2x32xf32>
    %502 = vector.extract_strided_slice %480 {offsets = [0, 64], sizes = [2, 32], strides = [1, 1]} : vector<2x96xf32> to vector<2x32xf32>
    %503 = arith.mulf %490, %502 : vector<2x32xf32>
    %504 = arith.addf %501, %503 : vector<2x32xf32>
    %505 = math.tanh %504 : vector<2x32xf32>
    %cst_164 = arith.constant 1.000000e+00 : f32
    %506 = vector.broadcast %cst_164 : f32 to vector<2x32xf32>
    %507 = arith.subf %506, %500 : vector<2x32xf32>
    %508 = arith.mulf %507, %505 : vector<2x32xf32>
    %509 = arith.mulf %500, %427 : vector<2x32xf32>
    %510 = arith.addf %508, %509 : vector<2x32xf32>
    %511 = arith.index_cast %473 : i32 to index
    %c0_165 = arith.constant 0 : index
    %c32_166 = arith.constant 32 : index
    %512 = vector.load %arg5[%511, %c0_165, %c32_166] : memref<8x2x64xf32, #tpu.memory_space<vmem>>, vector<1x2x32xf32>
    %513 = vector.shape_cast %512 : vector<1x2x32xf32> to vector<2x32xf32>
    %514 = vector.shape_cast %510 : vector<2x32xf32> to vector<1x2x32xf32>
    tpu.vector_store %arg5[%511, %c0_165, %c32_166], %514 {strides = array<i32>} : memref<8x2x64xf32, #tpu.memory_space<vmem>>, vector<1x2x32xf32>,
    %c6_i32 = arith.constant 6 : i32
    %515 = arith.index_cast %c6_i32 : i32 to index
    %c0_167 = arith.constant 0 : index
    %c0_168 = arith.constant 0 : index
    %516 = vector.load %arg7[%515, %c0_167, %c0_168] : memref<8x2x192xf32, #tpu.memory_space<vmem>>, vector<1x2x192xf32>
    %517 = vector.shape_cast %516 : vector<1x2x192xf32> to vector<2x192xf32>
    %518 = vector.extract_strided_slice %517 {offsets = [0, 0], sizes = [2, 96], strides = [1, 1]} : vector<2x192xf32> to vector<2x96xf32>
    %cst_169 = arith.constant dense<0.000000e+00> : vector<2x96xf32>
    %519 = tpu.matmul %468, %10, %cst_169 {dimension_numbers = #tpu.dot_dimension_numbers<[1], [0], [0], [1], [0, 0, 1, 1], [], []>} : vector<2x32xf32>, vector<32x96xf32>, vector<2x96xf32> -> vector<2x96xf32>
    %520 = vector.broadcast %13 : vector<1x96xf32> to vector<2x96xf32>
    %521 = arith.addf %519, %520 : vector<2x96xf32>
    %522 = vector.extract_strided_slice %518 {offsets = [0, 0], sizes = [2, 32], strides = [1, 1]} : vector<2x96xf32> to vector<2x32xf32>
    %523 = vector.extract_strided_slice %521 {offsets = [0, 0], sizes = [2, 32], strides = [1, 1]} : vector<2x96xf32> to vector<2x32xf32>
    %524 = arith.addf %522, %523 : vector<2x32xf32>
    %cst_170 = arith.constant 0.000000e+00 : f32
    %525 = vector.broadcast %cst_170 : f32 to vector<2x32xf32>
    %526 = arith.subf %525, %524 : vector<2x32xf32>
    %527 = math.exp %526 : vector<2x32xf32>
    %cst_171 = arith.constant 1.000000e+00 : f32
    %528 = vector.broadcast %cst_171 : f32 to vector<2x32xf32>
    %529 = arith.addf %528, %527 : vector<2x32xf32>
    %cst_172 = arith.constant 1.000000e+00 : f32
    %530 = vector.broadcast %cst_172 : f32 to vector<2x32xf32>
    %531 = arith.divf %530, %529 : vector<2x32xf32>
    %532 = vector.extract_strided_slice %518 {offsets = [0, 32], sizes = [2, 32], strides = [1, 1]} : vector<2x96xf32> to vector<2x32xf32>
    %533 = vector.extract_strided_slice %521 {offsets = [0, 32], sizes = [2, 32], strides = [1, 1]} : vector<2x96xf32> to vector<2x32xf32>
    %534 = arith.addf %532, %533 : vector<2x32xf32>
    %cst_173 = arith.constant 0.000000e+00 : f32
    %535 = vector.broadcast %cst_173 : f32 to vector<2x32xf32>
    %536 = arith.subf %535, %534 : vector<2x32xf32>
    %537 = math.exp %536 : vector<2x32xf32>
    %cst_174 = arith.constant 1.000000e+00 : f32
    %538 = vector.broadcast %cst_174 : f32 to vector<2x32xf32>
    %539 = arith.addf %538, %537 : vector<2x32xf32>
    %cst_175 = arith.constant 1.000000e+00 : f32
    %540 = vector.broadcast %cst_175 : f32 to vector<2x32xf32>
    %541 = arith.divf %540, %539 : vector<2x32xf32>
    %542 = vector.extract_strided_slice %518 {offsets = [0, 64], sizes = [2, 32], strides = [1, 1]} : vector<2x96xf32> to vector<2x32xf32>
    %543 = vector.extract_strided_slice %521 {offsets = [0, 64], sizes = [2, 32], strides = [1, 1]} : vector<2x96xf32> to vector<2x32xf32>
    %544 = arith.mulf %531, %543 : vector<2x32xf32>
    %545 = arith.addf %542, %544 : vector<2x32xf32>
    %546 = math.tanh %545 : vector<2x32xf32>
    %cst_176 = arith.constant 1.000000e+00 : f32
    %547 = vector.broadcast %cst_176 : f32 to vector<2x32xf32>
    %548 = arith.subf %547, %541 : vector<2x32xf32>
    %549 = arith.mulf %548, %546 : vector<2x32xf32>
    %550 = arith.mulf %541, %468 : vector<2x32xf32>
    %551 = arith.addf %549, %550 : vector<2x32xf32>
    %552 = arith.index_cast %c6_i32 : i32 to index
    %c0_177 = arith.constant 0 : index
    %c0_178 = arith.constant 0 : index
    %553 = vector.load %arg5[%552, %c0_177, %c0_178] : memref<8x2x64xf32, #tpu.memory_space<vmem>>, vector<1x2x32xf32>
    %554 = vector.shape_cast %553 : vector<1x2x32xf32> to vector<2x32xf32>
    %555 = vector.shape_cast %551 : vector<2x32xf32> to vector<1x2x32xf32>
    tpu.vector_store %arg5[%552, %c0_177, %c0_178], %555 {strides = array<i32>} : memref<8x2x64xf32, #tpu.memory_space<vmem>>, vector<1x2x32xf32>,
    %c7_i32_179 = arith.constant 7 : i32
    %556 = arith.subi %c7_i32_179, %c6_i32 : i32
    %557 = arith.index_cast %556 : i32 to index
    %c0_180 = arith.constant 0 : index
    %c0_181 = arith.constant 0 : index
    %558 = vector.load %arg7[%557, %c0_180, %c0_181] : memref<8x2x192xf32, #tpu.memory_space<vmem>>, vector<1x2x192xf32>
    %559 = vector.shape_cast %558 : vector<1x2x192xf32> to vector<2x192xf32>
    %560 = vector.extract_strided_slice %559 {offsets = [0, 96], sizes = [2, 96], strides = [1, 1]} : vector<2x192xf32> to vector<2x96xf32>
    %cst_182 = arith.constant dense<0.000000e+00> : vector<2x96xf32>
    %561 = tpu.matmul %510, %12, %cst_182 {dimension_numbers = #tpu.dot_dimension_numbers<[1], [0], [0], [1], [0, 0, 1, 1], [], []>} : vector<2x32xf32>, vector<32x96xf32>, vector<2x96xf32> -> vector<2x96xf32>
    %562 = vector.broadcast %14 : vector<1x96xf32> to vector<2x96xf32>
    %563 = arith.addf %561, %562 : vector<2x96xf32>
    %564 = vector.extract_strided_slice %560 {offsets = [0, 0], sizes = [2, 32], strides = [1, 1]} : vector<2x96xf32> to vector<2x32xf32>
    %565 = vector.extract_strided_slice %563 {offsets = [0, 0], sizes = [2, 32], strides = [1, 1]} : vector<2x96xf32> to vector<2x32xf32>
    %566 = arith.addf %564, %565 : vector<2x32xf32>
    %cst_183 = arith.constant 0.000000e+00 : f32
    %567 = vector.broadcast %cst_183 : f32 to vector<2x32xf32>
    %568 = arith.subf %567, %566 : vector<2x32xf32>
    %569 = math.exp %568 : vector<2x32xf32>
    %cst_184 = arith.constant 1.000000e+00 : f32
    %570 = vector.broadcast %cst_184 : f32 to vector<2x32xf32>
    %571 = arith.addf %570, %569 : vector<2x32xf32>
    %cst_185 = arith.constant 1.000000e+00 : f32
    %572 = vector.broadcast %cst_185 : f32 to vector<2x32xf32>
    %573 = arith.divf %572, %571 : vector<2x32xf32>
    %574 = vector.extract_strided_slice %560 {offsets = [0, 32], sizes = [2, 32], strides = [1, 1]} : vector<2x96xf32> to vector<2x32xf32>
    %575 = vector.extract_strided_slice %563 {offsets = [0, 32], sizes = [2, 32], strides = [1, 1]} : vector<2x96xf32> to vector<2x32xf32>
    %576 = arith.addf %574, %575 : vector<2x32xf32>
    %cst_186 = arith.constant 0.000000e+00 : f32
    %577 = vector.broadcast %cst_186 : f32 to vector<2x32xf32>
    %578 = arith.subf %577, %576 : vector<2x32xf32>
    %579 = math.exp %578 : vector<2x32xf32>
    %cst_187 = arith.constant 1.000000e+00 : f32
    %580 = vector.broadcast %cst_187 : f32 to vector<2x32xf32>
    %581 = arith.addf %580, %579 : vector<2x32xf32>
    %cst_188 = arith.constant 1.000000e+00 : f32
    %582 = vector.broadcast %cst_188 : f32 to vector<2x32xf32>
    %583 = arith.divf %582, %581 : vector<2x32xf32>
    %584 = vector.extract_strided_slice %560 {offsets = [0, 64], sizes = [2, 32], strides = [1, 1]} : vector<2x96xf32> to vector<2x32xf32>
    %585 = vector.extract_strided_slice %563 {offsets = [0, 64], sizes = [2, 32], strides = [1, 1]} : vector<2x96xf32> to vector<2x32xf32>
    %586 = arith.mulf %573, %585 : vector<2x32xf32>
    %587 = arith.addf %584, %586 : vector<2x32xf32>
    %588 = math.tanh %587 : vector<2x32xf32>
    %cst_189 = arith.constant 1.000000e+00 : f32
    %589 = vector.broadcast %cst_189 : f32 to vector<2x32xf32>
    %590 = arith.subf %589, %583 : vector<2x32xf32>
    %591 = arith.mulf %590, %588 : vector<2x32xf32>
    %592 = arith.mulf %583, %510 : vector<2x32xf32>
    %593 = arith.addf %591, %592 : vector<2x32xf32>
    %594 = arith.index_cast %556 : i32 to index
    %c0_190 = arith.constant 0 : index
    %c32_191 = arith.constant 32 : index
    %595 = vector.load %arg5[%594, %c0_190, %c32_191] : memref<8x2x64xf32, #tpu.memory_space<vmem>>, vector<1x2x32xf32>
    %596 = vector.shape_cast %595 : vector<1x2x32xf32> to vector<2x32xf32>
    %597 = vector.shape_cast %593 : vector<2x32xf32> to vector<1x2x32xf32>
    tpu.vector_store %arg5[%594, %c0_190, %c32_191], %597 {strides = array<i32>} : memref<8x2x64xf32, #tpu.memory_space<vmem>>, vector<1x2x32xf32>,
    %c7_i32_192 = arith.constant 7 : i32
    %598 = arith.index_cast %c7_i32_192 : i32 to index
    %c0_193 = arith.constant 0 : index
    %c0_194 = arith.constant 0 : index
    %599 = vector.load %arg7[%598, %c0_193, %c0_194] : memref<8x2x192xf32, #tpu.memory_space<vmem>>, vector<1x2x192xf32>
    %600 = vector.shape_cast %599 : vector<1x2x192xf32> to vector<2x192xf32>
    %601 = vector.extract_strided_slice %600 {offsets = [0, 0], sizes = [2, 96], strides = [1, 1]} : vector<2x192xf32> to vector<2x96xf32>
    %cst_195 = arith.constant dense<0.000000e+00> : vector<2x96xf32>
    %602 = tpu.matmul %551, %10, %cst_195 {dimension_numbers = #tpu.dot_dimension_numbers<[1], [0], [0], [1], [0, 0, 1, 1], [], []>} : vector<2x32xf32>, vector<32x96xf32>, vector<2x96xf32> -> vector<2x96xf32>
    %603 = vector.broadcast %13 : vector<1x96xf32> to vector<2x96xf32>
    %604 = arith.addf %602, %603 : vector<2x96xf32>
    %605 = vector.extract_strided_slice %601 {offsets = [0, 0], sizes = [2, 32], strides = [1, 1]} : vector<2x96xf32> to vector<2x32xf32>
    %606 = vector.extract_strided_slice %604 {offsets = [0, 0], sizes = [2, 32], strides = [1, 1]} : vector<2x96xf32> to vector<2x32xf32>
    %607 = arith.addf %605, %606 : vector<2x32xf32>
    %cst_196 = arith.constant 0.000000e+00 : f32
    %608 = vector.broadcast %cst_196 : f32 to vector<2x32xf32>
    %609 = arith.subf %608, %607 : vector<2x32xf32>
    %610 = math.exp %609 : vector<2x32xf32>
    %cst_197 = arith.constant 1.000000e+00 : f32
    %611 = vector.broadcast %cst_197 : f32 to vector<2x32xf32>
    %612 = arith.addf %611, %610 : vector<2x32xf32>
    %cst_198 = arith.constant 1.000000e+00 : f32
    %613 = vector.broadcast %cst_198 : f32 to vector<2x32xf32>
    %614 = arith.divf %613, %612 : vector<2x32xf32>
    %615 = vector.extract_strided_slice %601 {offsets = [0, 32], sizes = [2, 32], strides = [1, 1]} : vector<2x96xf32> to vector<2x32xf32>
    %616 = vector.extract_strided_slice %604 {offsets = [0, 32], sizes = [2, 32], strides = [1, 1]} : vector<2x96xf32> to vector<2x32xf32>
    %617 = arith.addf %615, %616 : vector<2x32xf32>
    %cst_199 = arith.constant 0.000000e+00 : f32
    %618 = vector.broadcast %cst_199 : f32 to vector<2x32xf32>
    %619 = arith.subf %618, %617 : vector<2x32xf32>
    %620 = math.exp %619 : vector<2x32xf32>
    %cst_200 = arith.constant 1.000000e+00 : f32
    %621 = vector.broadcast %cst_200 : f32 to vector<2x32xf32>
    %622 = arith.addf %621, %620 : vector<2x32xf32>
    %cst_201 = arith.constant 1.000000e+00 : f32
    %623 = vector.broadcast %cst_201 : f32 to vector<2x32xf32>
    %624 = arith.divf %623, %622 : vector<2x32xf32>
    %625 = vector.extract_strided_slice %601 {offsets = [0, 64], sizes = [2, 32], strides = [1, 1]} : vector<2x96xf32> to vector<2x32xf32>
    %626 = vector.extract_strided_slice %604 {offsets = [0, 64], sizes = [2, 32], strides = [1, 1]} : vector<2x96xf32> to vector<2x32xf32>
    %627 = arith.mulf %614, %626 : vector<2x32xf32>
    %628 = arith.addf %625, %627 : vector<2x32xf32>
    %629 = math.tanh %628 : vector<2x32xf32>
    %cst_202 = arith.constant 1.000000e+00 : f32
    %630 = vector.broadcast %cst_202 : f32 to vector<2x32xf32>
    %631 = arith.subf %630, %624 : vector<2x32xf32>
    %632 = arith.mulf %631, %629 : vector<2x32xf32>
    %633 = arith.mulf %624, %551 : vector<2x32xf32>
    %634 = arith.addf %632, %633 : vector<2x32xf32>
    %635 = arith.index_cast %c7_i32_192 : i32 to index
    %c0_203 = arith.constant 0 : index
    %c0_204 = arith.constant 0 : index
    %636 = vector.load %arg5[%635, %c0_203, %c0_204] : memref<8x2x64xf32, #tpu.memory_space<vmem>>, vector<1x2x32xf32>
    %637 = vector.shape_cast %636 : vector<1x2x32xf32> to vector<2x32xf32>
    %638 = vector.shape_cast %634 : vector<2x32xf32> to vector<1x2x32xf32>
    tpu.vector_store %arg5[%635, %c0_203, %c0_204], %638 {strides = array<i32>} : memref<8x2x64xf32, #tpu.memory_space<vmem>>, vector<1x2x32xf32>,
    %c7_i32_205 = arith.constant 7 : i32
    %639 = arith.subi %c7_i32_205, %c7_i32_192 : i32
    %640 = arith.index_cast %639 : i32 to index
    %c0_206 = arith.constant 0 : index
    %c0_207 = arith.constant 0 : index
    %641 = vector.load %arg7[%640, %c0_206, %c0_207] : memref<8x2x192xf32, #tpu.memory_space<vmem>>, vector<1x2x192xf32>
    %642 = vector.shape_cast %641 : vector<1x2x192xf32> to vector<2x192xf32>
    %643 = vector.extract_strided_slice %642 {offsets = [0, 96], sizes = [2, 96], strides = [1, 1]} : vector<2x192xf32> to vector<2x96xf32>
    %cst_208 = arith.constant dense<0.000000e+00> : vector<2x96xf32>
    %644 = tpu.matmul %593, %12, %cst_208 {dimension_numbers = #tpu.dot_dimension_numbers<[1], [0], [0], [1], [0, 0, 1, 1], [], []>} : vector<2x32xf32>, vector<32x96xf32>, vector<2x96xf32> -> vector<2x96xf32>
    %645 = vector.broadcast %14 : vector<1x96xf32> to vector<2x96xf32>
    %646 = arith.addf %644, %645 : vector<2x96xf32>
    %647 = vector.extract_strided_slice %643 {offsets = [0, 0], sizes = [2, 32], strides = [1, 1]} : vector<2x96xf32> to vector<2x32xf32>
    %648 = vector.extract_strided_slice %646 {offsets = [0, 0], sizes = [2, 32], strides = [1, 1]} : vector<2x96xf32> to vector<2x32xf32>
    %649 = arith.addf %647, %648 : vector<2x32xf32>
    %cst_209 = arith.constant 0.000000e+00 : f32
    %650 = vector.broadcast %cst_209 : f32 to vector<2x32xf32>
    %651 = arith.subf %650, %649 : vector<2x32xf32>
    %652 = math.exp %651 : vector<2x32xf32>
    %cst_210 = arith.constant 1.000000e+00 : f32
    %653 = vector.broadcast %cst_210 : f32 to vector<2x32xf32>
    %654 = arith.addf %653, %652 : vector<2x32xf32>
    %cst_211 = arith.constant 1.000000e+00 : f32
    %655 = vector.broadcast %cst_211 : f32 to vector<2x32xf32>
    %656 = arith.divf %655, %654 : vector<2x32xf32>
    %657 = vector.extract_strided_slice %643 {offsets = [0, 32], sizes = [2, 32], strides = [1, 1]} : vector<2x96xf32> to vector<2x32xf32>
    %658 = vector.extract_strided_slice %646 {offsets = [0, 32], sizes = [2, 32], strides = [1, 1]} : vector<2x96xf32> to vector<2x32xf32>
    %659 = arith.addf %657, %658 : vector<2x32xf32>
    %cst_212 = arith.constant 0.000000e+00 : f32
    %660 = vector.broadcast %cst_212 : f32 to vector<2x32xf32>
    %661 = arith.subf %660, %659 : vector<2x32xf32>
    %662 = math.exp %661 : vector<2x32xf32>
    %cst_213 = arith.constant 1.000000e+00 : f32
    %663 = vector.broadcast %cst_213 : f32 to vector<2x32xf32>
    %664 = arith.addf %663, %662 : vector<2x32xf32>
    %cst_214 = arith.constant 1.000000e+00 : f32
    %665 = vector.broadcast %cst_214 : f32 to vector<2x32xf32>
    %666 = arith.divf %665, %664 : vector<2x32xf32>
    %667 = vector.extract_strided_slice %643 {offsets = [0, 64], sizes = [2, 32], strides = [1, 1]} : vector<2x96xf32> to vector<2x32xf32>
    %668 = vector.extract_strided_slice %646 {offsets = [0, 64], sizes = [2, 32], strides = [1, 1]} : vector<2x96xf32> to vector<2x32xf32>
    %669 = arith.mulf %656, %668 : vector<2x32xf32>
    %670 = arith.addf %667, %669 : vector<2x32xf32>
    %671 = math.tanh %670 : vector<2x32xf32>
    %cst_215 = arith.constant 1.000000e+00 : f32
    %672 = vector.broadcast %cst_215 : f32 to vector<2x32xf32>
    %673 = arith.subf %672, %666 : vector<2x32xf32>
    %674 = arith.mulf %673, %671 : vector<2x32xf32>
    %675 = arith.mulf %666, %593 : vector<2x32xf32>
    %676 = arith.addf %674, %675 : vector<2x32xf32>
    %677 = arith.index_cast %639 : i32 to index
    %c0_216 = arith.constant 0 : index
    %c32_217 = arith.constant 32 : index
    %678 = vector.load %arg5[%677, %c0_216, %c32_217] : memref<8x2x64xf32, #tpu.memory_space<vmem>>, vector<1x2x32xf32>
    %679 = vector.shape_cast %678 : vector<1x2x32xf32> to vector<2x32xf32>
    %680 = vector.shape_cast %676 : vector<2x32xf32> to vector<1x2x32xf32>
    tpu.vector_store %arg5[%677, %c0_216, %c32_217], %680 {strides = array<i32>} : memref<8x2x64xf32, #tpu.memory_space<vmem>>, vector<1x2x32xf32>,
    %c8_i32 = arith.constant 8 : i32
    %c0_218 = arith.constant 0 : index
    %c0_219 = arith.constant 0 : index
    %681 = vector.load %arg6[%c0_218, %c0_219] : memref<2x64xf32, #tpu.memory_space<vmem>>, vector<2x32xf32>
    tpu.vector_store %arg6[%c0_218, %c0_219], %634 {strides = array<i32>} : memref<2x64xf32, #tpu.memory_space<vmem>>, vector<2x32xf32>,
    %c0_220 = arith.constant 0 : index
    %c32_221 = arith.constant 32 : index
    %682 = vector.load %arg6[%c0_220, %c32_221] : memref<2x64xf32, #tpu.memory_space<vmem>>, vector<2x32xf32>
    tpu.vector_store %arg6[%c0_220, %c32_221], %676 {strides = array<i32>} : memref<2x64xf32, #tpu.memory_space<vmem>>, vector<2x32xf32>,
    return
  }
  func.func @transform_0(%arg0: i32) -> (i32, i32, i32) {
    %c0_i32 = arith.constant 0 : i32
    %c0_i32_0 = arith.constant 0 : i32
    %c0_i32_1 = arith.constant 0 : i32
    return %c0_i32, %arg0, %c0_i32_0 : i32, i32, i32
  }
  func.func @transform_1(%arg0: i32) -> (i32, i32) {
    %c0_i32 = arith.constant 0 : i32
    %c0_i32_0 = arith.constant 0 : i32
    %c0_i32_1 = arith.constant 0 : i32
    return %c0_i32, %c0_i32_0 : i32, i32
  }
  func.func @transform_2(%arg0: i32) -> (i32, i32, i32) {
    %c0_i32 = arith.constant 0 : i32
    %c0_i32_0 = arith.constant 0 : i32
    %c0_i32_1 = arith.constant 0 : i32
    %c0_i32_2 = arith.constant 0 : i32
    return %c0_i32, %c0_i32_0, %c0_i32_1 : i32, i32, i32
  }
  func.func @transform_3(%arg0: i32) -> (i32, i32) {
    %c0_i32 = arith.constant 0 : i32
    %c0_i32_0 = arith.constant 0 : i32
    %c0_i32_1 = arith.constant 0 : i32
    return %c0_i32, %c0_i32_0 : i32, i32
  }
  func.func @transform_4(%arg0: i32) -> (i32, i32, i32) {
    %c0_i32 = arith.constant 0 : i32
    %c0_i32_0 = arith.constant 0 : i32
    %c0_i32_1 = arith.constant 0 : i32
    return %c0_i32, %arg0, %c0_i32_0 : i32, i32, i32
  }
  func.func @transform_5(%arg0: i32) -> (i32, i32) {
    %c0_i32 = arith.constant 0 : i32
    %c0_i32_0 = arith.constant 0 : i32
    return %arg0, %c0_i32 : i32, i32
  }
}

</mosaic_0001>

<llo_original>
// kernel: tpu_custom_call.1
$region0: #{tpu_custom_call.1}
  #allocation0 [shape = 'u32[]', space=smem, size = 0x4, offset = 0x4, fixed_abs, tag = 'smem constant byte address 0x4 - core index']
  #allocation1 [shape = 'u32[72,128]{1,0:T(1,128)}', space=vmem, size = 0x9000, scoped, tag = 'internal scratch']
  #allocation2 [shape = 'f32[8,2,192]{2,1,0:T(2,128)}', space=vmem, size = 0x4000, scoped, tag = 'scratch operand']
  %s0 = inlined_call_operand.hbm [shape: f32[8,2,32], index: 0, kind: input, shape index: {}]
  %s1 = inlined_call_operand.hbm [shape: f32[32,192], index: 1, kind: input, shape index: {}]
  %s2 = inlined_call_operand.hbm [shape: f32[2,32,96], index: 2, kind: input, shape index: {}]
  %s3 = inlined_call_operand.hbm [shape: f32[2,192], index: 3, kind: input, shape index: {}]
  %s4 = inlined_call_operand.hbm [shape: f32[8,2,64], index: 4, kind: output, shape index: {0}]
  %s5 = inlined_call_operand.hbm [shape: f32[2,64], index: 5, kind: output, shape index: {1}]
  %6 = xla_tuple %s4, %s5
  %s7 = sld [smem:[#allocation0]]
  $region50: #{tpu_custom_call.1} parent=0
    _
  %s9 = ssub.s32 1, %s7
  %s10 = scalar_select 0, %s9, %s7
  $region1: #{tpu_custom_call.1} parent=0
    #allocation3 [shape = 'u8[8192]{0}', space=vmem, size = 0x2000, scoped, tag = 'input window, operand 0, single buffered']
    #allocation4 [shape = 's32[1]{0}', space=sflag, size = 0x4, scoped, tag = 'scoped memory for tpu_custom_call.1']
    #allocation5 [shape = 's32[1]{0}', space=sflag, size = 0x4, scoped, tag = 'scoped memory for tpu_custom_call.1']
    #allocation6 [shape = 'u8[32768]{0}', space=vmem, size = 0x8000, scoped, tag = 'input window, operand 1, single buffered']
    #allocation7 [shape = 's32[1]{0}', space=sflag, size = 0x4, scoped, tag = 'scoped memory for tpu_custom_call.1']
    #allocation8 [shape = 'u8[32768]{0}', space=vmem, size = 0x8000, scoped, tag = 'input window, operand 2, single buffered']
    #allocation9 [shape = 'u8[2048]{0}', space=vmem, size = 0x800, scoped, tag = 'input window, operand 3, single buffered']
    #allocation10 [shape = 's32[1]{0}', space=sflag, size = 0x4, scoped, tag = 'scoped memory for tpu_custom_call.1']
    #allocation11 [shape = 'u8[8192]{0}', space=vmem, size = 0x2000, scoped, tag = 'output window, operand 0, single buffered']
    #allocation12 [shape = 'u8[1024]{0}', space=vmem, size = 0x400, scoped, tag = 'output window, operand 1, single buffered']
    #allocation13 [shape = 's32[1]{0}', space=sflag, size = 0x4, scoped, tag = 'scoped memory for tpu_custom_call.1']
    %11 = vsyncpa [#allocation4], 0
    %12 = vsyncpa [#allocation7], 0
    %13 = vsyncpa [#allocation10], 0
    %14 = vsyncpa [#allocation5], 0
    %15 = vsyncpa [#allocation13], 0
    // Predicated region
    $region2: #{tpu_custom_call.1} parent=1 // pred_check
      _
    $region3: #{tpu_custom_call.1} parent=1 // pred_check_branch
      %17 = sbr.rel (0) target = $region5
    $region4: #{tpu_custom_call.1} parent=1 // pred_region
      %19 = vsyncadd [#allocation4], 0
      %s20 = sshll.u32 %s0, 4
      %s21 = int_to_ptr.hbm [resolvable:$true] %s20
      %s22 = sshll.u32 [#allocation3], 4
      %s23 = int_to_ptr.vmem [resolvable:$true] %s22
      %28 = dma.hbm_to_vmem [thread:$0]  %s21, 256, %s23, [#allocation4], 32, 32, 2
    $region5: #{tpu_custom_call.1} parent=1 // pred_fallthru
      _
    // Predicated region
    $region6: #{tpu_custom_call.1} parent=1 // pred_check
      _
    $region7: #{tpu_custom_call.1} parent=1 // pred_check_branch
      %30 = sbr.rel (0) target = $region9
    $region8: #{tpu_custom_call.1} parent=1 // pred_region
      %32 = vsyncadd [#allocation7], 0
      %s33 = sshll.u32 %s1, 4
      %s34 = int_to_ptr.hbm [resolvable:$true] %s33
      %s35 = sshll.u32 [#allocation6], 4
      %s36 = int_to_ptr.vmem [resolvable:$true] %s35
      %41 = dma.hbm_to_vmem [thread:$0]  %s34, 1024, %s36, [#allocation7], 256, 256, 16
    $region9: #{tpu_custom_call.1} parent=1 // pred_fallthru
      _
    // Predicated region
    $region10: #{tpu_custom_call.1} parent=1 // pred_check
      _
    $region11: #{tpu_custom_call.1} parent=1 // pred_check_branch
      %43 = sbr.rel (0) target = $region13
    $region12: #{tpu_custom_call.1} parent=1 // pred_region
      %45 = vsyncadd [#allocation7], 0
      %s46 = sshll.u32 %s2, 4
      %s47 = int_to_ptr.hbm [resolvable:$true] %s46
      %s48 = sshll.u32 [#allocation8], 4
      %s49 = int_to_ptr.vmem [resolvable:$true] %s48
      %54 = dma.hbm_to_vmem [thread:$0]  %s47, 1024, %s49, [#allocation7], 128, 128, 8
    $region13: #{tpu_custom_call.1} parent=1 // pred_fallthru
      _
    // Predicated region
    $region14: #{tpu_custom_call.1} parent=1 // pred_check
      _
    $region15: #{tpu_custom_call.1} parent=1 // pred_check_branch
      %56 = sbr.rel (0) target = $region17
    $region16: #{tpu_custom_call.1} parent=1 // pred_region
      %58 = vsyncadd [#allocation10], 0
      %s60 = sshll.u32 %s3, 4
      %s61 = int_to_ptr.hbm [resolvable:$true] %s60
      %s62 = sshll.u32 [#allocation9], 4
      %s63 = int_to_ptr.vmem [resolvable:$true] %s62
      %65 = dma.hbm_to_vmem [thread:$0]  %s61, 64, %s63, [#allocation10]
    $region17: #{tpu_custom_call.1} parent=1 // pred_fallthru
      _
    // Predicated region
    $region18: #{tpu_custom_call.1} parent=1 // pred_check
      _
    $region19: #{tpu_custom_call.1} parent=1 // pred_check_branch
      %67 = sbr.rel (0) target = $region21
    $region20: #{tpu_custom_call.1} parent=1 // pred_region
      %69 = dma.done [#allocation4], 256
    $region21: #{tpu_custom_call.1} parent=1 // pred_fallthru
      _
    // Predicated region
    $region22: #{tpu_custom_call.1} parent=1 // pred_check
      _
    $region23: #{tpu_custom_call.1} parent=1 // pred_check_branch
      %71 = sbr.rel (0) target = $region25
    $region24: #{tpu_custom_call.1} parent=1 // pred_region
      %73 = dma.done [#allocation7], 1024
    $region25: #{tpu_custom_call.1} parent=1 // pred_fallthru
      _
    // Predicated region
    $region26: #{tpu_custom_call.1} parent=1 // pred_check
      _
    $region27: #{tpu_custom_call.1} parent=1 // pred_check_branch
      %75 = sbr.rel (0) target = $region29
    $region28: #{tpu_custom_call.1} parent=1 // pred_region
      %77 = dma.done [#allocation7], 1024
    $region29: #{tpu_custom_call.1} parent=1 // pred_fallthru
      _
    // Predicated region
    $region30: #{tpu_custom_call.1} parent=1 // pred_check
      _
    $region31: #{tpu_custom_call.1} parent=1 // pred_check_branch
      %79 = sbr.rel (0) target = $region33
    $region32: #{tpu_custom_call.1} parent=1 // pred_region
      %81 = dma.done [#allocation10], 64
    $region33: #{tpu_custom_call.1} parent=1 // pred_fallthru
      _
    %v82 = vld [vmem:[#allocation3] sm:$0x3]
    %v83 = vld [vmem:[#allocation3 + $0x2] sm:$0x3]
    %v84 = vld [vmem:[#allocation3 + $0x4] sm:$0x3]
    %v85 = vld [vmem:[#allocation3 + $0x6] sm:$0x3]
    %v86 = vld [vmem:[#allocation3 + $0x8] sm:$0x3]
    %v87 = vld [vmem:[#allocation3 + $0xa] sm:$0x3]
    %v88 = vld [vmem:[#allocation3 + $0xc] sm:$0x3]
    %v89 = vld [vmem:[#allocation3 + $0xe] sm:$0x3]
    %v90 = vld [vmem:[#allocation6] sm:$0xff]
    %v91 = vld [vmem:[#allocation6 + $0x8] sm:$0xff]
    %v92 = vld [vmem:[#allocation6 + $0x10] sm:$0xff]
    %v93 = vld [vmem:[#allocation6 + $0x18] sm:$0xff]
    %v94 = vld [vmem:[#allocation6 + $0x20] sm:$0xff]
    %v95 = vld [vmem:[#allocation6 + $0x28] sm:$0xff]
    %v96 = vld [vmem:[#allocation6 + $0x30] sm:$0xff]
    %v97 = vld [vmem:[#allocation6 + $0x38] sm:$0xff]
    %v98 = vld [vmem:[#allocation9] ss:$2 sm:$0x3]
    %v100 = vperm.slane %v98, 0
    %v101 = vperm.slane %v98, 1
    %112 = vst [vmem:[#allocation1] ss:$4 sm:$0xff] %v82
    %s113 = scalar_lea.vmem [#allocation1], 1
    %114 = vst [vmem:[%s113] ss:$4 sm:$0xff] %v83
    %s115 = scalar_lea.vmem [#allocation1], 2
    %116 = vst [vmem:[%s115] ss:$4 sm:$0xff] %v84
    %s117 = scalar_lea.vmem [#allocation1], 3
    %118 = vst [vmem:[%s117] ss:$4 sm:$0xff] %v85
    %s119 = scalar_lea.vmem [#allocation1], 32
    %120 = vst [vmem:[%s119] ss:$4 sm:$0xff] %v86
    %s121 = scalar_lea.vmem [#allocation1], 33
    %122 = vst [vmem:[%s121] ss:$4 sm:$0xff] %v87
    %s123 = scalar_lea.vmem [#allocation1], 34
    %124 = vst [vmem:[%s123] ss:$4 sm:$0xff] %v88
    %s125 = scalar_lea.vmem [#allocation1], 35
    %126 = vst [vmem:[%s125] ss:$4 sm:$0xff] %v89
    %v127 = vld.sshfl [vmem:[#allocation1] sm:$0xff pattern:$0x73625140]
    %v128 = vld.sshfl [vmem:[#allocation1 + $0x20] sm:$0xff pattern:$0x73625140]
    %vm129 = vcmask 261120
    %v130 = vsel %vm129, %v127, 0
    %v132 = vsel %vm129, %v128, 0
    %134 = vmatpush.msra.mxu0 0.0
    %135 = vmatpush.msra.mxu0 0.0
    %136 = vmatpush.msra.mxu0 0.0
    %137 = vmatpush.msra.mxu0 0.0
    %138 = vmatpush.msra.mxu0 0.0
    %139 = vmatpush.msra.mxu0 0.0
    %140 = vmatpush.msra.mxu0 0.0
    %141 = vmatpush.msra.mxu0 0.0
    %142 = vmatpush.msra.mxu0 0.0
    %143 = vmatpush.msra.mxu0 0.0
    %144 = vmatpush.msra.mxu0 0.0
    %145 = vmatpush.msra.mxu0 0.0
    %146 = vmatpush.msra.mxu0 %v96
    %147 = vmatpush.msra.mxu0 %v94
    %148 = vmatpush.msra.mxu0 %v92
    %149 = vmatpush.msra.mxu0 %v90
    %150 = vmatmul.f32.gmra.mxu0 %v130
    %v151 = vpop.f32.mrf.mxu0
    %v152 = vadd.f32 %v100, %v151
    %153 = vmatmul.f32.gmra.mxu0 %v132
    %v154 = vpop.f32.mrf.mxu0
    %v155 = vadd.f32 %v100, %v154
    %156 = vdwg.mxu0
    %157 = vmatpush.msra.mxu0 0.0
    %158 = vmatpush.msra.mxu0 0.0
    %159 = vmatpush.msra.mxu0 0.0
    %160 = vmatpush.msra.mxu0 0.0
    %161 = vmatpush.msra.mxu0 0.0
    %162 = vmatpush.msra.mxu0 0.0
    %163 = vmatpush.msra.mxu0 0.0
    %164 = vmatpush.msra.mxu0 0.0
    %165 = vmatpush.msra.mxu0 0.0
    %166 = vmatpush.msra.mxu0 0.0
    %167 = vmatpush.msra.mxu0 0.0
    %168 = vmatpush.msra.mxu0 0.0
    %169 = vmatpush.msra.mxu0 %v97
    %170 = vmatpush.msra.mxu0 %v95
    %171 = vmatpush.msra.mxu0 %v93
    %172 = vmatpush.msra.mxu0 %v91
    %173 = vmatmul.f32.gmra.mxu0 %v130
    %v174 = vpop.f32.mrf.mxu0
    %v175 = vadd.f32 %v101, %v174
    %176 = vmatmul.f32.gmra.mxu0 %v132
    %v177 = vpop.f32.mrf.mxu0
    %v178 = vadd.f32 %v101, %v177
    %179 = vdwg.mxu0
    %v184 = vrot.slane %v175, 6
    %v185 = vrot.slane %v178, 6
    %vm186 = vcmask 1041408
    %v187 = vsel %vm186, %v152, %v184
    %vm188 = vcmask 1043458
    %v189 = vsel %vm188, %v152, %v184
    %v190 = vrot.slane %v189, 2
    %vm191 = vcmask 1045508
    %v192 = vsel %vm191, %v152, %v184
    %v193 = vrot.slane %v192, 4
    %vm194 = vcmask 1045504
    %v195 = vsel %vm194, %v184, %v152
    %v196 = vrot.slane %v195, 6
    %v197 = vsel %vm186, %v155, %v185
    %v198 = vsel %vm188, %v155, %v185
    %v199 = vrot.slane %v198, 2
    %v200 = vsel %vm191, %v155, %v185
    %v201 = vrot.slane %v200, 4
    %v202 = vsel %vm194, %v185, %v155
    %v203 = vrot.slane %v202, 6
    %vm212 = vcmask 519170
    %vm213 = vmor %vm212, %vm186
    %214 = vst.msk [vmem:[#allocation2] sm:$0xf] %vm213, %v187
    %215 = vst.msk [vmem:[#allocation2 + $0x4] sm:$0xf] %vm213, %v190
    %216 = vst.msk [vmem:[#allocation2 + $0x8] sm:$0xf] %vm213, %v193
    %217 = vst.msk [vmem:[#allocation2 + $0xc] sm:$0xf] %vm213, %v196
    %218 = vst.msk [vmem:[#allocation2 + $0x10] sm:$0xf] %vm213, %v197
    %219 = vst.msk [vmem:[#allocation2 + $0x14] sm:$0xf] %vm213, %v199
    %220 = vst.msk [vmem:[#allocation2 + $0x18] sm:$0xf] %vm213, %v201
    %221 = vst.msk [vmem:[#allocation2 + $0x1c] sm:$0xf] %vm213, %v203
    %v222 = vld [vmem:[#allocation8] sm:$0xff]
    %v223 = vld [vmem:[#allocation8 + $0x8] sm:$0xff]
    %v224 = vld [vmem:[#allocation8 + $0x10] sm:$0xff]
    %v225 = vld [vmem:[#allocation8 + $0x18] sm:$0xff]
    %s226 = scalar_lea.vmem [#allocation8], 32
    %v227 = vld [vmem:[%s226] sm:$0xff]
    %v228 = vld [vmem:[%s226 + $0x8] sm:$0xff]
    %v229 = vld [vmem:[%s226 + $0x10] sm:$0xff]
    %v230 = vld [vmem:[%s226 + $0x18] sm:$0xff]
    %v231 = vld [vmem:[#allocation9 + $0x1] sm:$0x1]
    %v232 = vld [vmem:[#allocation9 + $0x1] sm:$0x5]
    %v233 = vld [vmem:[#allocation2] sm:$0xf]
    %v234 = vperm.slane %v231, 0
    %v236 = vsel %vm129, 0.0, 0
    %238 = vmatpush.msra.mxu0 0.0
    %239 = vmatpush.msra.mxu0 0.0
    %240 = vmatpush.msra.mxu0 0.0
    %241 = vmatpush.msra.mxu0 0.0
    %242 = vmatpush.msra.mxu0 0.0
    %243 = vmatpush.msra.mxu0 0.0
    %244 = vmatpush.msra.mxu0 0.0
    %245 = vmatpush.msra.mxu0 0.0
    %246 = vmatpush.msra.mxu0 0.0
    %247 = vmatpush.msra.mxu0 0.0
    %248 = vmatpush.msra.mxu0 0.0
    %249 = vmatpush.msra.mxu0 0.0
    %250 = vmatpush.msra.mxu0 %v225
    %251 = vmatpush.msra.mxu0 %v224
    %252 = vmatpush.msra.mxu0 %v223
    %253 = vmatpush.msra.mxu0 %v222
    %254 = vmatmul.f32.gmra.mxu0 %v236
    %v255 = vpop.f32.mrf.mxu0
    %v256 = vadd.f32 %v234, %v255
    %257 = vdwg.mxu0
    %v258 = vadd.f32 %v233, %v256
    %v259 = vsub.f32 0.0, %v258
    %v260 = vmul.f32 %v259, 1.442695
    %v261 = vpow.pop %v260
    %v262 = vadd.f32 %v261, 1.0
    %v263 = vrcp.pop %v262
    %v264 = vmul.f32 %v262, %v263
    %v265 = vsub.f32 1.0, %v264
    %v266 = vmul.f32 %v263, %v265
    %v267 = vadd.f32 %v263, %v266
    %vm268 = vweird.f32 %v262
    %vm269 = vweird.f32 %v263
    %vm270 = vmor %vm268, %vm269
    %v271 = vsel %vm270, %v263, %v267
    %v272 = vand.u32 2147483647, %v262
    %vm273 = vcmp.eq.f32.partialorder %v272, 8.507059e+37
    %v274 = vand.u32 %v262, 2147483648
    %v275 = vor.u32 1.1754944e-38, %v274
    %v276 = vsel %vm273, %v275, %v271
    %v277 = vmul.f32 1.0, %v276
    %279 = vrot.lane.b32.xlu0 %v256, 64
    %v280 = vpop.permute.xlu0 %279
    %v282 = vmul.f32 %v277, %v280
    %284 = vrot.lane.b32.xlu0 %v282, 64
    %v285 = vpop.permute.xlu0 %284
    %v287 = vadd.f32 %v233, %v285
    %v288 = vtanh.pop %v287
    %v289 = vsub.f32 1.0, %v277
    %291 = vrot.lane.b32.xlu0 %v288, 96
    %v292 = vpop.permute.xlu0 %291
    %v294 = vmul.f32 %v289, %v292
    %v295 = vmul.f32 %v277, 0.0
    %v296 = vadd.f32 %v294, %v295
    %298 = vst [vmem:[#allocation1] ss:$4 sm:$0xff] %v296
    %v299 = vld.sshfl [vmem:[#allocation1] sm:$0xff pattern:$0x73625140]
    %300 = vrot.lane.b32.xlu0 %v299, 96
    %v301 = vpop.permute.xlu0 %300
    %vm303 = vcmask 254976
    %304 = vst.msk [vmem:[#allocation11] sm:$0x3] %vm303, %v301
    %s305 = scalar_lea.vmem [#allocation2], 28
    %v306 = vld [vmem:[%s305] sm:$0xf]
    %v308 = vperm.slane %v232, 0
    %v309 = vperm.slane %v232, 2
    %v312 = vperm.slane %v308, 0
    %v313 = vperm.slane %v309, 0
    %316 = vrot.lane.b32.xlu0 %v312, 32
    %v317 = vpop.permute.xlu0 %316
    %318 = vrot.lane.b32.xlu0 %v313, 32
    %v319 = vpop.permute.xlu0 %318
    %v320 = vsel %vm129, %v317, %v319
    %322 = vmatpush.msra.mxu0 0.0
    %323 = vmatpush.msra.mxu0 0.0
    %324 = vmatpush.msra.mxu0 0.0
    %325 = vmatpush.msra.mxu0 0.0
    %326 = vmatpush.msra.mxu0 0.0
    %327 = vmatpush.msra.mxu0 0.0
    %328 = vmatpush.msra.mxu0 0.0
    %329 = vmatpush.msra.mxu0 0.0
    %330 = vmatpush.msra.mxu0 0.0
    %331 = vmatpush.msra.mxu0 0.0
    %332 = vmatpush.msra.mxu0 0.0
    %333 = vmatpush.msra.mxu0 0.0
    %334 = vmatpush.msra.mxu0 %v230
    %335 = vmatpush.msra.mxu0 %v229
    %336 = vmatpush.msra.mxu0 %v228
    %337 = vmatpush.msra.mxu0 %v227
    %338 = vmatmul.f32.gmra.mxu0 %v236
    %v339 = vpop.f32.mrf.mxu0
    %v340 = vadd.f32 %v320, %v339
    %341 = vdwg.mxu0
    %343 = vrot.lane.b32.xlu0 %v340, 96
    %v344 = vpop.permute.xlu0 %343
    %v346 = vadd.f32 %v306, %v344
    %v347 = vsub.f32 0.0, %v346
    %v348 = vmul.f32 %v347, 1.442695
    %v349 = vpow.pop %v348
    %v350 = vadd.f32 %v349, 1.0
    %v351 = vrcp.pop %v350
    %v352 = vmul.f32 %v350, %v351
    %v353 = vsub.f32 1.0, %v352
    %v354 = vmul.f32 %v351, %v353
    %v355 = vadd.f32 %v351, %v354
    %vm356 = vweird.f32 %v350
    %vm357 = vweird.f32 %v351
    %vm358 = vmor %vm356, %vm357
    %v359 = vsel %vm358, %v351, %v355
    %v360 = vand.u32 2147483647, %v350
    %vm361 = vcmp.eq.f32.partialorder %v360, 8.507059e+37
    %v362 = vand.u32 %v350, 2147483648
    %v363 = vor.u32 1.1754944e-38, %v362
    %v364 = vsel %vm361, %v363, %v359
    %v365 = vmul.f32 1.0, %v364
    %v367 = vrot.slane %v306, 2
    %v369 = vadd.f32 %v367, %v344
    %v370 = vsub.f32 0.0, %v369
    %v371 = vmul.f32 %v370, 1.442695
    %v372 = vpow.pop %v371
    %v373 = vadd.f32 %v372, 1.0
    %v374 = vrcp.pop %v373
    %v375 = vmul.f32 %v373, %v374
    %v376 = vsub.f32 1.0, %v375
    %v377 = vmul.f32 %v374, %v376
    %v378 = vadd.f32 %v374, %v377
    %vm379 = vweird.f32 %v373
    %vm380 = vweird.f32 %v374
    %vm381 = vmor %vm379, %vm380
    %v382 = vsel %vm381, %v374, %v378
    %v383 = vand.u32 2147483647, %v373
    %vm384 = vcmp.eq.f32.partialorder %v383, 8.507059e+37
    %v385 = vand.u32 %v373, 2147483648
    %v386 = vor.u32 1.1754944e-38, %v385
    %v387 = vsel %vm384, %v386, %v382
    %v388 = vmul.f32 1.0, %v387
    %389 = vrot.lane.b32.xlu0 %v340, 32
    %v390 = vpop.permute.xlu0 %389
    %v392 = vmul.f32 %v365, %v390
    %393 = vrot.lane.b32.xlu0 %v306, 96
    %v394 = vpop.permute.xlu0 %393
    %v395 = vrot.slane %v394, 2
    %398 = vrot.lane.b32.xlu0 %v392, 32
    %v399 = vpop.permute.xlu0 %398
    %v401 = vadd.f32 %v395, %v399
    %v402 = vtanh.pop %v401
    %v403 = vsub.f32 1.0, %v388
    %v404 = vmul.f32 %v403, %v402
    %v405 = vmul.f32 %v388, 0.0
    %v406 = vadd.f32 %v404, %v405
    %408 = vst [vmem:[#allocation1] ss:$4 sm:$0xff] %v406
    %v409 = vld.sshfl [vmem:[#allocation1] sm:$0xff pattern:$0x73625140]
    %410 = vrot.lane.b32.xlu0 %v409, 32
    %v411 = vpop.permute.xlu0 %410
    %s413 = scalar_lea.vmem [#allocation11], 14
    %vm414 = vcmask 517376
    %415 = vst.msk [vmem:[%s413] sm:$0x3] %vm414, %v411
    %s416 = scalar_lea.vmem [#allocation2], 4
    %v417 = vld [vmem:[%s416] sm:$0xf]
    %418 = vst [vmem:[#allocation1] ss:$4 sm:$0xff] %v296
    %v419 = vld.sshfl [vmem:[#allocation1] sm:$0xff pattern:$0x73625140]
    %420 = vrot.lane.b32.xlu0 %v419, 96
    %v421 = vpop.permute.xlu0 %420
    %v422 = vsel %vm129, %v421, 0
    %424 = vmatpush.msra.mxu0 0.0
    %425 = vmatpush.msra.mxu0 0.0
    %426 = vmatpush.msra.mxu0 0.0
    %427 = vmatpush.msra.mxu0 0.0
    %428 = vmatpush.msra.mxu0 0.0
    %429 = vmatpush.msra.mxu0 0.0
    %430 = vmatpush.msra.mxu0 0.0
    %431 = vmatpush.msra.mxu0 0.0
    %432 = vmatpush.msra.mxu0 0.0
    %433 = vmatpush.msra.mxu0 0.0
    %434 = vmatpush.msra.mxu0 0.0
    %435 = vmatpush.msra.mxu0 0.0
    %436 = vmatpush.msra.mxu0 %v225
    %437 = vmatpush.msra.mxu0 %v224
    %438 = vmatpush.msra.mxu0 %v223
    %439 = vmatpush.msra.mxu0 %v222
    %440 = vmatmul.f32.gmra.mxu0 %v422
    %v441 = vpop.f32.mrf.mxu0
    %v442 = vadd.f32 %v234, %v441
    %443 = vdwg.mxu0
    %v444 = vadd.f32 %v417, %v442
    %v445 = vsub.f32 0.0, %v444
    %v446 = vmul.f32 %v445, 1.442695
    %v447 = vpow.pop %v446
    %v448 = vadd.f32 %v447, 1.0
    %v449 = vrcp.pop %v448
    %v450 = vmul.f32 %v448, %v449
    %v451 = vsub.f32 1.0, %v450
    %v452 = vmul.f32 %v449, %v451
    %v453 = vadd.f32 %v449, %v452
    %vm454 = vweird.f32 %v448
    %vm455 = vweird.f32 %v449
    %vm456 = vmor %vm454, %vm455
    %v457 = vsel %vm456, %v449, %v453
    %v458 = vand.u32 2147483647, %v448
    %vm459 = vcmp.eq.f32.partialorder %v458, 8.507059e+37
    %v460 = vand.u32 %v448, 2147483648
    %v461 = vor.u32 1.1754944e-38, %v460
    %v462 = vsel %vm459, %v461, %v457
    %v463 = vmul.f32 1.0, %v462
    %465 = vrot.lane.b32.xlu0 %v442, 64
    %v466 = vpop.permute.xlu0 %465
    %v468 = vmul.f32 %v463, %v466
    %470 = vrot.lane.b32.xlu0 %v468, 64
    %v471 = vpop.permute.xlu0 %470
    %v473 = vadd.f32 %v417, %v471
    %v474 = vtanh.pop %v473
    %v475 = vsub.f32 1.0, %v463
    %477 = vrot.lane.b32.xlu0 %v474, 96
    %v478 = vpop.permute.xlu0 %477
    %v480 = vmul.f32 %v475, %v478
    %v481 = vmul.f32 %v463, %v296
    %v482 = vadd.f32 %v480, %v481
    %484 = vst [vmem:[#allocation1] ss:$4 sm:$0xff] %v482
    %v485 = vld.sshfl [vmem:[#allocation1] sm:$0xff pattern:$0x73625140]
    %486 = vrot.lane.b32.xlu0 %v485, 96
    %v487 = vpop.permute.xlu0 %486
    %s489 = scalar_lea.vmem [#allocation11], 2
    %490 = vst.msk [vmem:[%s489] sm:$0x3] %vm303, %v487
    %s491 = scalar_lea.vmem [#allocation2], 24
    %v492 = vld [vmem:[%s491] sm:$0xf]
    %v493 = vsel %vm129, %v406, 0
    %495 = vmatpush.msra.mxu0 0.0
    %496 = vmatpush.msra.mxu0 0.0
    %497 = vmatpush.msra.mxu0 0.0
    %498 = vmatpush.msra.mxu0 0.0
    %499 = vmatpush.msra.mxu0 0.0
    %500 = vmatpush.msra.mxu0 0.0
    %501 = vmatpush.msra.mxu0 0.0
    %502 = vmatpush.msra.mxu0 0.0
    %503 = vmatpush.msra.mxu0 0.0
    %504 = vmatpush.msra.mxu0 0.0
    %505 = vmatpush.msra.mxu0 0.0
    %506 = vmatpush.msra.mxu0 0.0
    %507 = vmatpush.msra.mxu0 %v230
    %508 = vmatpush.msra.mxu0 %v229
    %509 = vmatpush.msra.mxu0 %v228
    %510 = vmatpush.msra.mxu0 %v227
    %511 = vmatmul.f32.gmra.mxu0 %v493
    %v512 = vpop.f32.mrf.mxu0
    %v513 = vadd.f32 %v320, %v512
    %514 = vdwg.mxu0
    %516 = vrot.lane.b32.xlu0 %v513, 96
    %v517 = vpop.permute.xlu0 %516
    %v519 = vadd.f32 %v492, %v517
    %v520 = vsub.f32 0.0, %v519
    %v521 = vmul.f32 %v520, 1.442695
    %v522 = vpow.pop %v521
    %v523 = vadd.f32 %v522, 1.0
    %v524 = vrcp.pop %v523
    %v525 = vmul.f32 %v523, %v524
    %v526 = vsub.f32 1.0, %v525
    %v527 = vmul.f32 %v524, %v526
    %v528 = vadd.f32 %v524, %v527
    %vm529 = vweird.f32 %v523
    %vm530 = vweird.f32 %v524
    %vm531 = vmor %vm529, %vm530
    %v532 = vsel %vm531, %v524, %v528
    %v533 = vand.u32 2147483647, %v523
    %vm534 = vcmp.eq.f32.partialorder %v533, 8.507059e+37
    %v535 = vand.u32 %v523, 2147483648
    %v536 = vor.u32 1.1754944e-38, %v535
    %v537 = vsel %vm534, %v536, %v532
    %v538 = vmul.f32 1.0, %v537
    %v540 = vrot.slane %v492, 2
    %v542 = vadd.f32 %v540, %v517
    %v543 = vsub.f32 0.0, %v542
    %v544 = vmul.f32 %v543, 1.442695
    %v545 = vpow.pop %v544
    %v546 = vadd.f32 %v545, 1.0
    %v547 = vrcp.pop %v546
    %v548 = vmul.f32 %v546, %v547
    %v549 = vsub.f32 1.0, %v548
    %v550 = vmul.f32 %v547, %v549
    %v551 = vadd.f32 %v547, %v550
    %vm552 = vweird.f32 %v546
    %vm553 = vweird.f32 %v547
    %vm554 = vmor %vm552, %vm553
    %v555 = vsel %vm554, %v547, %v551
    %v556 = vand.u32 2147483647, %v546
    %vm557 = vcmp.eq.f32.partialorder %v556, 8.507059e+37
    %v558 = vand.u32 %v546, 2147483648
    %v559 = vor.u32 1.1754944e-38, %v558
    %v560 = vsel %vm557, %v559, %v555
    %v561 = vmul.f32 1.0, %v560
    %562 = vrot.lane.b32.xlu0 %v513, 32
    %v563 = vpop.permute.xlu0 %562
    %v565 = vmul.f32 %v538, %v563
    %566 = vrot.lane.b32.xlu0 %v492, 96
    %v567 = vpop.permute.xlu0 %566
    %v568 = vrot.slane %v567, 2
    %571 = vrot.lane.b32.xlu0 %v565, 32
    %v572 = vpop.permute.xlu0 %571
    %v574 = vadd.f32 %v568, %v572
    %v575 = vtanh.pop %v574
    %v576 = vsub.f32 1.0, %v561
    %v577 = vmul.f32 %v576, %v575
    %v578 = vmul.f32 %v561, %v406
    %v579 = vadd.f32 %v577, %v578
    %581 = vst [vmem:[#allocation1] ss:$4 sm:$0xff] %v579
    %v582 = vld.sshfl [vmem:[#allocation1] sm:$0xff pattern:$0x73625140]
    %583 = vrot.lane.b32.xlu0 %v582, 32
    %v584 = vpop.permute.xlu0 %583
    %s586 = scalar_lea.vmem [#allocation11], 12
    %587 = vst.msk [vmem:[%s586] sm:$0x3] %vm414, %v584
    %s588 = scalar_lea.vmem [#allocation2], 8
    %v589 = vld [vmem:[%s588] sm:$0xf]
    %590 = vst [vmem:[#allocation1] ss:$4 sm:$0xff] %v482
    %v591 = vld.sshfl [vmem:[#allocation1] sm:$0xff pattern:$0x73625140]
    %592 = vrot.lane.b32.xlu0 %v591, 96
    %v593 = vpop.permute.xlu0 %592
    %v594 = vsel %vm129, %v593, 0
    %596 = vmatpush.msra.mxu0 0.0
    %597 = vmatpush.msra.mxu0 0.0
    %598 = vmatpush.msra.mxu0 0.0
    %599 = vmatpush.msra.mxu0 0.0
    %600 = vmatpush.msra.mxu0 0.0
    %601 = vmatpush.msra.mxu0 0.0
    %602 = vmatpush.msra.mxu0 0.0
    %603 = vmatpush.msra.mxu0 0.0
    %604 = vmatpush.msra.mxu0 0.0
    %605 = vmatpush.msra.mxu0 0.0
    %606 = vmatpush.msra.mxu0 0.0
    %607 = vmatpush.msra.mxu0 0.0
    %608 = vmatpush.msra.mxu0 %v225
    %609 = vmatpush.msra.mxu0 %v224
    %610 = vmatpush.msra.mxu0 %v223
    %611 = vmatpush.msra.mxu0 %v222
    %612 = vmatmul.f32.gmra.mxu0 %v594
    %v613 = vpop.f32.mrf.mxu0
    %v614 = vadd.f32 %v234, %v613
    %615 = vdwg.mxu0
    %v616 = vadd.f32 %v589, %v614
    %v617 = vsub.f32 0.0, %v616
    %v618 = vmul.f32 %v617, 1.442695
    %v619 = vpow.pop %v618
    %v620 = vadd.f32 %v619, 1.0
    %v621 = vrcp.pop %v620
    %v622 = vmul.f32 %v620, %v621
    %v623 = vsub.f32 1.0, %v622
    %v624 = vmul.f32 %v621, %v623
    %v625 = vadd.f32 %v621, %v624
    %vm626 = vweird.f32 %v620
    %vm627 = vweird.f32 %v621
    %vm628 = vmor %vm626, %vm627
    %v629 = vsel %vm628, %v621, %v625
    %v630 = vand.u32 2147483647, %v620
    %vm631 = vcmp.eq.f32.partialorder %v630, 8.507059e+37
    %v632 = vand.u32 %v620, 2147483648
    %v633 = vor.u32 1.1754944e-38, %v632
    %v634 = vsel %vm631, %v633, %v629
    %v635 = vmul.f32 1.0, %v634
    %637 = vrot.lane.b32.xlu0 %v614, 64
    %v638 = vpop.permute.xlu0 %637
    %v640 = vmul.f32 %v635, %v638
    %642 = vrot.lane.b32.xlu0 %v640, 64
    %v643 = vpop.permute.xlu0 %642
    %v645 = vadd.f32 %v589, %v643
    %v646 = vtanh.pop %v645
    %v647 = vsub.f32 1.0, %v635
    %649 = vrot.lane.b32.xlu0 %v646, 96
    %v650 = vpop.permute.xlu0 %649
    %v652 = vmul.f32 %v647, %v650
    %v653 = vmul.f32 %v635, %v482
    %v654 = vadd.f32 %v652, %v653
    %656 = vst [vmem:[#allocation1] ss:$4 sm:$0xff] %v654
    %v657 = vld.sshfl [vmem:[#allocation1] sm:$0xff pattern:$0x73625140]
    %658 = vrot.lane.b32.xlu0 %v657, 96
    %v659 = vpop.permute.xlu0 %658
    %s661 = scalar_lea.vmem [#allocation11], 4
    %662 = vst.msk [vmem:[%s661] sm:$0x3] %vm303, %v659
    %s663 = scalar_lea.vmem [#allocation2], 20
    %v664 = vld [vmem:[%s663] sm:$0xf]
    %v665 = vsel %vm129, %v579, 0
    %667 = vmatpush.msra.mxu0 0.0
    %668 = vmatpush.msra.mxu0 0.0
    %669 = vmatpush.msra.mxu0 0.0
    %670 = vmatpush.msra.mxu0 0.0
    %671 = vmatpush.msra.mxu0 0.0
    %672 = vmatpush.msra.mxu0 0.0
    %673 = vmatpush.msra.mxu0 0.0
    %674 = vmatpush.msra.mxu0 0.0
    %675 = vmatpush.msra.mxu0 0.0
    %676 = vmatpush.msra.mxu0 0.0
    %677 = vmatpush.msra.mxu0 0.0
    %678 = vmatpush.msra.mxu0 0.0
    %679 = vmatpush.msra.mxu0 %v230
    %680 = vmatpush.msra.mxu0 %v229
    %681 = vmatpush.msra.mxu0 %v228
    %682 = vmatpush.msra.mxu0 %v227
    %683 = vmatmul.f32.gmra.mxu0 %v665
    %v684 = vpop.f32.mrf.mxu0
    %v685 = vadd.f32 %v320, %v684
    %686 = vdwg.mxu0
    %688 = vrot.lane.b32.xlu0 %v685, 96
    %v689 = vpop.permute.xlu0 %688
    %v691 = vadd.f32 %v664, %v689
    %v692 = vsub.f32 0.0, %v691
    %v693 = vmul.f32 %v692, 1.442695
    %v694 = vpow.pop %v693
    %v695 = vadd.f32 %v694, 1.0
    %v696 = vrcp.pop %v695
    %v697 = vmul.f32 %v695, %v696
    %v698 = vsub.f32 1.0, %v697
    %v699 = vmul.f32 %v696, %v698
    %v700 = vadd.f32 %v696, %v699
    %vm701 = vweird.f32 %v695
    %vm702 = vweird.f32 %v696
    %vm703 = vmor %vm701, %vm702
    %v704 = vsel %vm703, %v696, %v700
    %v705 = vand.u32 2147483647, %v695
    %vm706 = vcmp.eq.f32.partialorder %v705, 8.507059e+37
    %v707 = vand.u32 %v695, 2147483648
    %v708 = vor.u32 1.1754944e-38, %v707
    %v709 = vsel %vm706, %v708, %v704
    %v710 = vmul.f32 1.0, %v709
    %v712 = vrot.slane %v664, 2
    %v714 = vadd.f32 %v712, %v689
    %v715 = vsub.f32 0.0, %v714
    %v716 = vmul.f32 %v715, 1.442695
    %v717 = vpow.pop %v716
    %v718 = vadd.f32 %v717, 1.0
    %v719 = vrcp.pop %v718
    %v720 = vmul.f32 %v718, %v719
    %v721 = vsub.f32 1.0, %v720
    %v722 = vmul.f32 %v719, %v721
    %v723 = vadd.f32 %v719, %v722
    %vm724 = vweird.f32 %v718
    %vm725 = vweird.f32 %v719
    %vm726 = vmor %vm724, %vm725
    %v727 = vsel %vm726, %v719, %v723
    %v728 = vand.u32 2147483647, %v718
    %vm729 = vcmp.eq.f32.partialorder %v728, 8.507059e+37
    %v730 = vand.u32 %v718, 2147483648
    %v731 = vor.u32 1.1754944e-38, %v730
    %v732 = vsel %vm729, %v731, %v727
    %v733 = vmul.f32 1.0, %v732
    %734 = vrot.lane.b32.xlu0 %v685, 32
    %v735 = vpop.permute.xlu0 %734
    %v737 = vmul.f32 %v710, %v735
    %738 = vrot.lane.b32.xlu0 %v664, 96
    %v739 = vpop.permute.xlu0 %738
    %v740 = vrot.slane %v739, 2
    %743 = vrot.lane.b32.xlu0 %v737, 32
    %v744 = vpop.permute.xlu0 %743
    %v746 = vadd.f32 %v740, %v744
    %v747 = vtanh.pop %v746
    %v748 = vsub.f32 1.0, %v733
    %v749 = vmul.f32 %v748, %v747
    %v750 = vmul.f32 %v733, %v579
    %v751 = vadd.f32 %v749, %v750
    %753 = vst [vmem:[#allocation1] ss:$4 sm:$0xff] %v751
    %v754 = vld.sshfl [vmem:[#allocation1] sm:$0xff pattern:$0x73625140]
    %755 = vrot.lane.b32.xlu0 %v754, 32
    %v756 = vpop.permute.xlu0 %755
    %s758 = scalar_lea.vmem [#allocation11], 10
    %759 = vst.msk [vmem:[%s758] sm:$0x3] %vm414, %v756
    %s760 = scalar_lea.vmem [#allocation2], 12
    %v761 = vld [vmem:[%s760] sm:$0xf]
    %762 = vst [vmem:[#allocation1] ss:$4 sm:$0xff] %v654
    %v763 = vld.sshfl [vmem:[#allocation1] sm:$0xff pattern:$0x73625140]
    %764 = vrot.lane.b32.xlu0 %v763, 96
    %v765 = vpop.permute.xlu0 %764
    %v766 = vsel %vm129, %v765, 0
    %768 = vmatpush.msra.mxu0 0.0
    %769 = vmatpush.msra.mxu0 0.0
    %770 = vmatpush.msra.mxu0 0.0
    %771 = vmatpush.msra.mxu0 0.0
    %772 = vmatpush.msra.mxu0 0.0
    %773 = vmatpush.msra.mxu0 0.0
    %774 = vmatpush.msra.mxu0 0.0
    %775 = vmatpush.msra.mxu0 0.0
    %776 = vmatpush.msra.mxu0 0.0
    %777 = vmatpush.msra.mxu0 0.0
    %778 = vmatpush.msra.mxu0 0.0
    %779 = vmatpush.msra.mxu0 0.0
    %780 = vmatpush.msra.mxu0 %v225
    %781 = vmatpush.msra.mxu0 %v224
    %782 = vmatpush.msra.mxu0 %v223
    %783 = vmatpush.msra.mxu0 %v222
    %784 = vmatmul.f32.gmra.mxu0 %v766
    %v785 = vpop.f32.mrf.mxu0
    %v786 = vadd.f32 %v234, %v785
    %787 = vdwg.mxu0
    %v788 = vadd.f32 %v761, %v786
    %v789 = vsub.f32 0.0, %v788
    %v790 = vmul.f32 %v789, 1.442695
    %v791 = vpow.pop %v790
    %v792 = vadd.f32 %v791, 1.0
    %v793 = vrcp.pop %v792
    %v794 = vmul.f32 %v792, %v793
    %v795 = vsub.f32 1.0, %v794
    %v796 = vmul.f32 %v793, %v795
    %v797 = vadd.f32 %v793, %v796
    %vm798 = vweird.f32 %v792
    %vm799 = vweird.f32 %v793
    %vm800 = vmor %vm798, %vm799
    %v801 = vsel %vm800, %v793, %v797
    %v802 = vand.u32 2147483647, %v792
    %vm803 = vcmp.eq.f32.partialorder %v802, 8.507059e+37
    %v804 = vand.u32 %v792, 2147483648
    %v805 = vor.u32 1.1754944e-38, %v804
    %v806 = vsel %vm803, %v805, %v801
    %v807 = vmul.f32 1.0, %v806
    %809 = vrot.lane.b32.xlu0 %v786, 64
    %v810 = vpop.permute.xlu0 %809
    %v812 = vmul.f32 %v807, %v810
    %814 = vrot.lane.b32.xlu0 %v812, 64
    %v815 = vpop.permute.xlu0 %814
    %v817 = vadd.f32 %v761, %v815
    %v818 = vtanh.pop %v817
    %v819 = vsub.f32 1.0, %v807
    %821 = vrot.lane.b32.xlu0 %v818, 96
    %v822 = vpop.permute.xlu0 %821
    %v824 = vmul.f32 %v819, %v822
    %v825 = vmul.f32 %v807, %v654
    %v826 = vadd.f32 %v824, %v825
    %828 = vst [vmem:[#allocation1] ss:$4 sm:$0xff] %v826
    %v829 = vld.sshfl [vmem:[#allocation1] sm:$0xff pattern:$0x73625140]
    %830 = vrot.lane.b32.xlu0 %v829, 96
    %v831 = vpop.permute.xlu0 %830
    %s833 = scalar_lea.vmem [#allocation11], 6
    %834 = vst.msk [vmem:[%s833] sm:$0x3] %vm303, %v831
    %s835 = scalar_lea.vmem [#allocation2], 16
    %v836 = vld [vmem:[%s835] sm:$0xf]
    %v837 = vsel %vm129, %v751, 0
    %839 = vmatpush.msra.mxu0 0.0
    %840 = vmatpush.msra.mxu0 0.0
    %841 = vmatpush.msra.mxu0 0.0
    %842 = vmatpush.msra.mxu0 0.0
    %843 = vmatpush.msra.mxu0 0.0
    %844 = vmatpush.msra.mxu0 0.0
    %845 = vmatpush.msra.mxu0 0.0
    %846 = vmatpush.msra.mxu0 0.0
    %847 = vmatpush.msra.mxu0 0.0
    %848 = vmatpush.msra.mxu0 0.0
    %849 = vmatpush.msra.mxu0 0.0
    %850 = vmatpush.msra.mxu0 0.0
    %851 = vmatpush.msra.mxu0 %v230
    %852 = vmatpush.msra.mxu0 %v229
    %853 = vmatpush.msra.mxu0 %v228
    %854 = vmatpush.msra.mxu0 %v227
    %855 = vmatmul.f32.gmra.mxu0 %v837
    %v856 = vpop.f32.mrf.mxu0
    %v857 = vadd.f32 %v320, %v856
    %858 = vdwg.mxu0
    %860 = vrot.lane.b32.xlu0 %v857, 96
    %v861 = vpop.permute.xlu0 %860
    %v863 = vadd.f32 %v836, %v861
    %v864 = vsub.f32 0.0, %v863
    %v865 = vmul.f32 %v864, 1.442695
    %v866 = vpow.pop %v865
    %v867 = vadd.f32 %v866, 1.0
    %v868 = vrcp.pop %v867
    %v869 = vmul.f32 %v867, %v868
    %v870 = vsub.f32 1.0, %v869
    %v871 = vmul.f32 %v868, %v870
    %v872 = vadd.f32 %v868, %v871
    %vm873 = vweird.f32 %v867
    %vm874 = vweird.f32 %v868
    %vm875 = vmor %vm873, %vm874
    %v876 = vsel %vm875, %v868, %v872
    %v877 = vand.u32 2147483647, %v867
    %vm878 = vcmp.eq.f32.partialorder %v877, 8.507059e+37
    %v879 = vand.u32 %v867, 2147483648
    %v880 = vor.u32 1.1754944e-38, %v879
    %v881 = vsel %vm878, %v880, %v876
    %v882 = vmul.f32 1.0, %v881
    %v884 = vrot.slane %v836, 2
    %v886 = vadd.f32 %v884, %v861
    %v887 = vsub.f32 0.0, %v886
    %v888 = vmul.f32 %v887, 1.442695
    %v889 = vpow.pop %v888
    %v890 = vadd.f32 %v889, 1.0
    %v891 = vrcp.pop %v890
    %v892 = vmul.f32 %v890, %v891
    %v893 = vsub.f32 1.0, %v892
    %v894 = vmul.f32 %v891, %v893
    %v895 = vadd.f32 %v891, %v894
    %vm896 = vweird.f32 %v890
    %vm897 = vweird.f32 %v891
    %vm898 = vmor %vm896, %vm897
    %v899 = vsel %vm898, %v891, %v895
    %v900 = vand.u32 2147483647, %v890
    %vm901 = vcmp.eq.f32.partialorder %v900, 8.507059e+37
    %v902 = vand.u32 %v890, 2147483648
    %v903 = vor.u32 1.1754944e-38, %v902
    %v904 = vsel %vm901, %v903, %v899
    %v905 = vmul.f32 1.0, %v904
    %906 = vrot.lane.b32.xlu0 %v857, 32
    %v907 = vpop.permute.xlu0 %906
    %v909 = vmul.f32 %v882, %v907
    %910 = vrot.lane.b32.xlu0 %v836, 96
    %v911 = vpop.permute.xlu0 %910
    %v912 = vrot.slane %v911, 2
    %915 = vrot.lane.b32.xlu0 %v909, 32
    %v916 = vpop.permute.xlu0 %915
    %v918 = vadd.f32 %v912, %v916
    %v919 = vtanh.pop %v918
    %v920 = vsub.f32 1.0, %v905
    %v921 = vmul.f32 %v920, %v919
    %v922 = vmul.f32 %v905, %v751
    %v923 = vadd.f32 %v921, %v922
    %925 = vst [vmem:[#allocation1] ss:$4 sm:$0xff] %v923
    %v926 = vld.sshfl [vmem:[#allocation1] sm:$0xff pattern:$0x73625140]
    %927 = vrot.lane.b32.xlu0 %v926, 32
    %v928 = vpop.permute.xlu0 %927
    %s930 = scalar_lea.vmem [#allocation11], 8
    %931 = vst.msk [vmem:[%s930] sm:$0x3] %vm414, %v928
    %v932 = vld [vmem:[%s835] sm:$0xf]
    %933 = vst [vmem:[#allocation1] ss:$4 sm:$0xff] %v826
    %v934 = vld.sshfl [vmem:[#allocation1] sm:$0xff pattern:$0x73625140]
    %935 = vrot.lane.b32.xlu0 %v934, 96
    %v936 = vpop.permute.xlu0 %935
    %v937 = vsel %vm129, %v936, 0
    %939 = vmatpush.msra.mxu0 0.0
    %940 = vmatpush.msra.mxu0 0.0
    %941 = vmatpush.msra.mxu0 0.0
    %942 = vmatpush.msra.mxu0 0.0
    %943 = vmatpush.msra.mxu0 0.0
    %944 = vmatpush.msra.mxu0 0.0
    %945 = vmatpush.msra.mxu0 0.0
    %946 = vmatpush.msra.mxu0 0.0
    %947 = vmatpush.msra.mxu0 0.0
    %948 = vmatpush.msra.mxu0 0.0
    %949 = vmatpush.msra.mxu0 0.0
    %950 = vmatpush.msra.mxu0 0.0
    %951 = vmatpush.msra.mxu0 %v225
    %952 = vmatpush.msra.mxu0 %v224
    %953 = vmatpush.msra.mxu0 %v223
    %954 = vmatpush.msra.mxu0 %v222
    %955 = vmatmul.f32.gmra.mxu0 %v937
    %v956 = vpop.f32.mrf.mxu0
    %v957 = vadd.f32 %v234, %v956
    %958 = vdwg.mxu0
    %v959 = vadd.f32 %v932, %v957
    %v960 = vsub.f32 0.0, %v959
    %v961 = vmul.f32 %v960, 1.442695
    %v962 = vpow.pop %v961
    %v963 = vadd.f32 %v962, 1.0
    %v964 = vrcp.pop %v963
    %v965 = vmul.f32 %v963, %v964
    %v966 = vsub.f32 1.0, %v965
    %v967 = vmul.f32 %v964, %v966
    %v968 = vadd.f32 %v964, %v967
    %vm969 = vweird.f32 %v963
    %vm970 = vweird.f32 %v964
    %vm971 = vmor %vm969, %vm970
    %v972 = vsel %vm971, %v964, %v968
    %v973 = vand.u32 2147483647, %v963
    %vm974 = vcmp.eq.f32.partialorder %v973, 8.507059e+37
    %v975 = vand.u32 %v963, 2147483648
    %v976 = vor.u32 1.1754944e-38, %v975
    %v977 = vsel %vm974, %v976, %v972
    %v978 = vmul.f32 1.0, %v977
    %980 = vrot.lane.b32.xlu0 %v957, 64
    %v981 = vpop.permute.xlu0 %980
    %v983 = vmul.f32 %v978, %v981
    %985 = vrot.lane.b32.xlu0 %v983, 64
    %v986 = vpop.permute.xlu0 %985
    %v988 = vadd.f32 %v932, %v986
    %v989 = vtanh.pop %v988
    %v990 = vsub.f32 1.0, %v978
    %992 = vrot.lane.b32.xlu0 %v989, 96
    %v993 = vpop.permute.xlu0 %992
    %v995 = vmul.f32 %v990, %v993
    %v996 = vmul.f32 %v978, %v826
    %v997 = vadd.f32 %v995, %v996
    %999 = vst [vmem:[#allocation1] ss:$4 sm:$0xff] %v997
    %v1000 = vld.sshfl [vmem:[#allocation1] sm:$0xff pattern:$0x73625140]
    %1001 = vrot.lane.b32.xlu0 %v1000, 96
    %v1002 = vpop.permute.xlu0 %1001
    %1004 = vst.msk [vmem:[%s930] sm:$0x3] %vm303, %v1002
    %v1005 = vld [vmem:[%s760] sm:$0xf]
    %v1006 = vsel %vm129, %v923, 0
    %1008 = vmatpush.msra.mxu0 0.0
    %1009 = vmatpush.msra.mxu0 0.0
    %1010 = vmatpush.msra.mxu0 0.0
    %1011 = vmatpush.msra.mxu0 0.0
    %1012 = vmatpush.msra.mxu0 0.0
    %1013 = vmatpush.msra.mxu0 0.0
    %1014 = vmatpush.msra.mxu0 0.0
    %1015 = vmatpush.msra.mxu0 0.0
    %1016 = vmatpush.msra.mxu0 0.0
    %1017 = vmatpush.msra.mxu0 0.0
    %1018 = vmatpush.msra.mxu0 0.0
    %1019 = vmatpush.msra.mxu0 0.0
    %1020 = vmatpush.msra.mxu0 %v230
    %1021 = vmatpush.msra.mxu0 %v229
    %1022 = vmatpush.msra.mxu0 %v228
    %1023 = vmatpush.msra.mxu0 %v227
    %1024 = vmatmul.f32.gmra.mxu0 %v1006
    %v1025 = vpop.f32.mrf.mxu0
    %v1026 = vadd.f32 %v320, %v1025
    %1027 = vdwg.mxu0
    %1029 = vrot.lane.b32.xlu0 %v1026, 96
    %v1030 = vpop.permute.xlu0 %1029
    %v1032 = vadd.f32 %v1005, %v1030
    %v1033 = vsub.f32 0.0, %v1032
    %v1034 = vmul.f32 %v1033, 1.442695
    %v1035 = vpow.pop %v1034
    %v1036 = vadd.f32 %v1035, 1.0
    %v1037 = vrcp.pop %v1036
    %v1038 = vmul.f32 %v1036, %v1037
    %v1039 = vsub.f32 1.0, %v1038
    %v1040 = vmul.f32 %v1037, %v1039
    %v1041 = vadd.f32 %v1037, %v1040
    %vm1042 = vweird.f32 %v1036
    %vm1043 = vweird.f32 %v1037
    %vm1044 = vmor %vm1042, %vm1043
    %v1045 = vsel %vm1044, %v1037, %v1041
    %v1046 = vand.u32 2147483647, %v1036
    %vm1047 = vcmp.eq.f32.partialorder %v1046, 8.507059e+37
    %v1048 = vand.u32 %v1036, 2147483648
    %v1049 = vor.u32 1.1754944e-38, %v1048
    %v1050 = vsel %vm1047, %v1049, %v1045
    %v1051 = vmul.f32 1.0, %v1050
    %v1053 = vrot.slane %v1005, 2
    %v1055 = vadd.f32 %v1053, %v1030
    %v1056 = vsub.f32 0.0, %v1055
    %v1057 = vmul.f32 %v1056, 1.442695
    %v1058 = vpow.pop %v1057
    %v1059 = vadd.f32 %v1058, 1.0
    %v1060 = vrcp.pop %v1059
    %v1061 = vmul.f32 %v1059, %v1060
    %v1062 = vsub.f32 1.0, %v1061
    %v1063 = vmul.f32 %v1060, %v1062
    %v1064 = vadd.f32 %v1060, %v1063
    %vm1065 = vweird.f32 %v1059
    %vm1066 = vweird.f32 %v1060
    %vm1067 = vmor %vm1065, %vm1066
    %v1068 = vsel %vm1067, %v1060, %v1064
    %v1069 = vand.u32 2147483647, %v1059
    %vm1070 = vcmp.eq.f32.partialorder %v1069, 8.507059e+37
    %v1071 = vand.u32 %v1059, 2147483648
    %v1072 = vor.u32 1.1754944e-38, %v1071
    %v1073 = vsel %vm1070, %v1072, %v1068
    %v1074 = vmul.f32 1.0, %v1073
    %1075 = vrot.lane.b32.xlu0 %v1026, 32
    %v1076 = vpop.permute.xlu0 %1075
    %v1078 = vmul.f32 %v1051, %v1076
    %1079 = vrot.lane.b32.xlu0 %v1005, 96
    %v1080 = vpop.permute.xlu0 %1079
    %v1081 = vrot.slane %v1080, 2
    %1084 = vrot.lane.b32.xlu0 %v1078, 32
    %v1085 = vpop.permute.xlu0 %1084
    %v1087 = vadd.f32 %v1081, %v1085
    %v1088 = vtanh.pop %v1087
    %v1089 = vsub.f32 1.0, %v1074
    %v1090 = vmul.f32 %v1089, %v1088
    %v1091 = vmul.f32 %v1074, %v923
    %v1092 = vadd.f32 %v1090, %v1091
    %1094 = vst [vmem:[#allocation1] ss:$4 sm:$0xff] %v1092
    %v1095 = vld.sshfl [vmem:[#allocation1] sm:$0xff pattern:$0x73625140]
    %1096 = vrot.lane.b32.xlu0 %v1095, 32
    %v1097 = vpop.permute.xlu0 %1096
    %1099 = vst.msk [vmem:[%s833] sm:$0x3] %vm414, %v1097
    %v1100 = vld [vmem:[%s663] sm:$0xf]
    %1101 = vst [vmem:[#allocation1] ss:$4 sm:$0xff] %v997
    %v1102 = vld.sshfl [vmem:[#allocation1] sm:$0xff pattern:$0x73625140]
    %1103 = vrot.lane.b32.xlu0 %v1102, 96
    %v1104 = vpop.permute.xlu0 %1103
    %v1105 = vsel %vm129, %v1104, 0
    %1107 = vmatpush.msra.mxu0 0.0
    %1108 = vmatpush.msra.mxu0 0.0
    %1109 = vmatpush.msra.mxu0 0.0
    %1110 = vmatpush.msra.mxu0 0.0
    %1111 = vmatpush.msra.mxu0 0.0
    %1112 = vmatpush.msra.mxu0 0.0
    %1113 = vmatpush.msra.mxu0 0.0
    %1114 = vmatpush.msra.mxu0 0.0
    %1115 = vmatpush.msra.mxu0 0.0
    %1116 = vmatpush.msra.mxu0 0.0
    %1117 = vmatpush.msra.mxu0 0.0
    %1118 = vmatpush.msra.mxu0 0.0
    %1119 = vmatpush.msra.mxu0 %v225
    %1120 = vmatpush.msra.mxu0 %v224
    %1121 = vmatpush.msra.mxu0 %v223
    %1122 = vmatpush.msra.mxu0 %v222
    %1123 = vmatmul.f32.gmra.mxu0 %v1105
    %v1124 = vpop.f32.mrf.mxu0
    %v1125 = vadd.f32 %v234, %v1124
    %1126 = vdwg.mxu0
    %v1127 = vadd.f32 %v1100, %v1125
    %v1128 = vsub.f32 0.0, %v1127
    %v1129 = vmul.f32 %v1128, 1.442695
    %v1130 = vpow.pop %v1129
    %v1131 = vadd.f32 %v1130, 1.0
    %v1132 = vrcp.pop %v1131
    %v1133 = vmul.f32 %v1131, %v1132
    %v1134 = vsub.f32 1.0, %v1133
    %v1135 = vmul.f32 %v1132, %v1134
    %v1136 = vadd.f32 %v1132, %v1135
    %vm1137 = vweird.f32 %v1131
    %vm1138 = vweird.f32 %v1132
    %vm1139 = vmor %vm1137, %vm1138
    %v1140 = vsel %vm1139, %v1132, %v1136
    %v1141 = vand.u32 2147483647, %v1131
    %vm1142 = vcmp.eq.f32.partialorder %v1141, 8.507059e+37
    %v1143 = vand.u32 %v1131, 2147483648
    %v1144 = vor.u32 1.1754944e-38, %v1143
    %v1145 = vsel %vm1142, %v1144, %v1140
    %v1146 = vmul.f32 1.0, %v1145
    %1148 = vrot.lane.b32.xlu0 %v1125, 64
    %v1149 = vpop.permute.xlu0 %1148
    %v1151 = vmul.f32 %v1146, %v1149
    %1153 = vrot.lane.b32.xlu0 %v1151, 64
    %v1154 = vpop.permute.xlu0 %1153
    %v1156 = vadd.f32 %v1100, %v1154
    %v1157 = vtanh.pop %v1156
    %v1158 = vsub.f32 1.0, %v1146
    %1160 = vrot.lane.b32.xlu0 %v1157, 96
    %v1161 = vpop.permute.xlu0 %1160
    %v1163 = vmul.f32 %v1158, %v1161
    %v1164 = vmul.f32 %v1146, %v997
    %v1165 = vadd.f32 %v1163, %v1164
    %1167 = vst [vmem:[#allocation1] ss:$4 sm:$0xff] %v1165
    %v1168 = vld.sshfl [vmem:[#allocation1] sm:$0xff pattern:$0x73625140]
    %1169 = vrot.lane.b32.xlu0 %v1168, 96
    %v1170 = vpop.permute.xlu0 %1169
    %1172 = vst.msk [vmem:[%s758] sm:$0x3] %vm303, %v1170
    %v1173 = vld [vmem:[%s588] sm:$0xf]
    %v1174 = vsel %vm129, %v1092, 0
    %1176 = vmatpush.msra.mxu0 0.0
    %1177 = vmatpush.msra.mxu0 0.0
    %1178 = vmatpush.msra.mxu0 0.0
    %1179 = vmatpush.msra.mxu0 0.0
    %1180 = vmatpush.msra.mxu0 0.0
    %1181 = vmatpush.msra.mxu0 0.0
    %1182 = vmatpush.msra.mxu0 0.0
    %1183 = vmatpush.msra.mxu0 0.0
    %1184 = vmatpush.msra.mxu0 0.0
    %1185 = vmatpush.msra.mxu0 0.0
    %1186 = vmatpush.msra.mxu0 0.0
    %1187 = vmatpush.msra.mxu0 0.0
    %1188 = vmatpush.msra.mxu0 %v230
    %1189 = vmatpush.msra.mxu0 %v229
    %1190 = vmatpush.msra.mxu0 %v228
    %1191 = vmatpush.msra.mxu0 %v227
    %1192 = vmatmul.f32.gmra.mxu0 %v1174
    %v1193 = vpop.f32.mrf.mxu0
    %v1194 = vadd.f32 %v320, %v1193
    %1195 = vdwg.mxu0
    %1197 = vrot.lane.b32.xlu0 %v1194, 96
    %v1198 = vpop.permute.xlu0 %1197
    %v1200 = vadd.f32 %v1173, %v1198
    %v1201 = vsub.f32 0.0, %v1200
    %v1202 = vmul.f32 %v1201, 1.442695
    %v1203 = vpow.pop %v1202
    %v1204 = vadd.f32 %v1203, 1.0
    %v1205 = vrcp.pop %v1204
    %v1206 = vmul.f32 %v1204, %v1205
    %v1207 = vsub.f32 1.0, %v1206
    %v1208 = vmul.f32 %v1205, %v1207
    %v1209 = vadd.f32 %v1205, %v1208
    %vm1210 = vweird.f32 %v1204
    %vm1211 = vweird.f32 %v1205
    %vm1212 = vmor %vm1210, %vm1211
    %v1213 = vsel %vm1212, %v1205, %v1209
    %v1214 = vand.u32 2147483647, %v1204
    %vm1215 = vcmp.eq.f32.partialorder %v1214, 8.507059e+37
    %v1216 = vand.u32 %v1204, 2147483648
    %v1217 = vor.u32 1.1754944e-38, %v1216
    %v1218 = vsel %vm1215, %v1217, %v1213
    %v1219 = vmul.f32 1.0, %v1218
    %v1221 = vrot.slane %v1173, 2
    %v1223 = vadd.f32 %v1221, %v1198
    %v1224 = vsub.f32 0.0, %v1223
    %v1225 = vmul.f32 %v1224, 1.442695
    %v1226 = vpow.pop %v1225
    %v1227 = vadd.f32 %v1226, 1.0
    %v1228 = vrcp.pop %v1227
    %v1229 = vmul.f32 %v1227, %v1228
    %v1230 = vsub.f32 1.0, %v1229
    %v1231 = vmul.f32 %v1228, %v1230
    %v1232 = vadd.f32 %v1228, %v1231
    %vm1233 = vweird.f32 %v1227
    %vm1234 = vweird.f32 %v1228
    %vm1235 = vmor %vm1233, %vm1234
    %v1236 = vsel %vm1235, %v1228, %v1232
    %v1237 = vand.u32 2147483647, %v1227
    %vm1238 = vcmp.eq.f32.partialorder %v1237, 8.507059e+37
    %v1239 = vand.u32 %v1227, 2147483648
    %v1240 = vor.u32 1.1754944e-38, %v1239
    %v1241 = vsel %vm1238, %v1240, %v1236
    %v1242 = vmul.f32 1.0, %v1241
    %1243 = vrot.lane.b32.xlu0 %v1194, 32
    %v1244 = vpop.permute.xlu0 %1243
    %v1246 = vmul.f32 %v1219, %v1244
    %1247 = vrot.lane.b32.xlu0 %v1173, 96
    %v1248 = vpop.permute.xlu0 %1247
    %v1249 = vrot.slane %v1248, 2
    %1252 = vrot.lane.b32.xlu0 %v1246, 32
    %v1253 = vpop.permute.xlu0 %1252
    %v1255 = vadd.f32 %v1249, %v1253
    %v1256 = vtanh.pop %v1255
    %v1257 = vsub.f32 1.0, %v1242
    %v1258 = vmul.f32 %v1257, %v1256
    %v1259 = vmul.f32 %v1242, %v1092
    %v1260 = vadd.f32 %v1258, %v1259
    %1262 = vst [vmem:[#allocation1] ss:$4 sm:$0xff] %v1260
    %v1263 = vld.sshfl [vmem:[#allocation1] sm:$0xff pattern:$0x73625140]
    %1264 = vrot.lane.b32.xlu0 %v1263, 32
    %v1265 = vpop.permute.xlu0 %1264
    %1267 = vst.msk [vmem:[%s661] sm:$0x3] %vm414, %v1265
    %v1268 = vld [vmem:[%s491] sm:$0xf]
    %1269 = vst [vmem:[#allocation1] ss:$4 sm:$0xff] %v1165
    %v1270 = vld.sshfl [vmem:[#allocation1] sm:$0xff pattern:$0x73625140]
    %1271 = vrot.lane.b32.xlu0 %v1270, 96
    %v1272 = vpop.permute.xlu0 %1271
    %v1273 = vsel %vm129, %v1272, 0
    %1275 = vmatpush.msra.mxu0 0.0
    %1276 = vmatpush.msra.mxu0 0.0
    %1277 = vmatpush.msra.mxu0 0.0
    %1278 = vmatpush.msra.mxu0 0.0
    %1279 = vmatpush.msra.mxu0 0.0
    %1280 = vmatpush.msra.mxu0 0.0
    %1281 = vmatpush.msra.mxu0 0.0
    %1282 = vmatpush.msra.mxu0 0.0
    %1283 = vmatpush.msra.mxu0 0.0
    %1284 = vmatpush.msra.mxu0 0.0
    %1285 = vmatpush.msra.mxu0 0.0
    %1286 = vmatpush.msra.mxu0 0.0
    %1287 = vmatpush.msra.mxu0 %v225
    %1288 = vmatpush.msra.mxu0 %v224
    %1289 = vmatpush.msra.mxu0 %v223
    %1290 = vmatpush.msra.mxu0 %v222
    %1291 = vmatmul.f32.gmra.mxu0 %v1273
    %v1292 = vpop.f32.mrf.mxu0
    %v1293 = vadd.f32 %v234, %v1292
    %1294 = vdwg.mxu0
    %v1295 = vadd.f32 %v1268, %v1293
    %v1296 = vsub.f32 0.0, %v1295
    %v1297 = vmul.f32 %v1296, 1.442695
    %v1298 = vpow.pop %v1297
    %v1299 = vadd.f32 %v1298, 1.0
    %v1300 = vrcp.pop %v1299
    %v1301 = vmul.f32 %v1299, %v1300
    %v1302 = vsub.f32 1.0, %v1301
    %v1303 = vmul.f32 %v1300, %v1302
    %v1304 = vadd.f32 %v1300, %v1303
    %vm1305 = vweird.f32 %v1299
    %vm1306 = vweird.f32 %v1300
    %vm1307 = vmor %vm1305, %vm1306
    %v1308 = vsel %vm1307, %v1300, %v1304
    %v1309 = vand.u32 2147483647, %v1299
    %vm1310 = vcmp.eq.f32.partialorder %v1309, 8.507059e+37
    %v1311 = vand.u32 %v1299, 2147483648
    %v1312 = vor.u32 1.1754944e-38, %v1311
    %v1313 = vsel %vm1310, %v1312, %v1308
    %v1314 = vmul.f32 1.0, %v1313
    %1316 = vrot.lane.b32.xlu0 %v1293, 64
    %v1317 = vpop.permute.xlu0 %1316
    %v1319 = vmul.f32 %v1314, %v1317
    %1321 = vrot.lane.b32.xlu0 %v1319, 64
    %v1322 = vpop.permute.xlu0 %1321
    %v1324 = vadd.f32 %v1268, %v1322
    %v1325 = vtanh.pop %v1324
    %v1326 = vsub.f32 1.0, %v1314
    %1328 = vrot.lane.b32.xlu0 %v1325, 96
    %v1329 = vpop.permute.xlu0 %1328
    %v1331 = vmul.f32 %v1326, %v1329
    %v1332 = vmul.f32 %v1314, %v1165
    %v1333 = vadd.f32 %v1331, %v1332
    %1335 = vst [vmem:[#allocation1] ss:$4 sm:$0xff] %v1333
    %v1336 = vld.sshfl [vmem:[#allocation1] sm:$0xff pattern:$0x73625140]
    %1337 = vrot.lane.b32.xlu0 %v1336, 96
    %v1338 = vpop.permute.xlu0 %1337
    %1340 = vst.msk [vmem:[%s586] sm:$0x3] %vm303, %v1338
    %v1341 = vld [vmem:[%s416] sm:$0xf]
    %v1342 = vsel %vm129, %v1260, 0
    %1344 = vmatpush.msra.mxu0 0.0
    %1345 = vmatpush.msra.mxu0 0.0
    %1346 = vmatpush.msra.mxu0 0.0
    %1347 = vmatpush.msra.mxu0 0.0
    %1348 = vmatpush.msra.mxu0 0.0
    %1349 = vmatpush.msra.mxu0 0.0
    %1350 = vmatpush.msra.mxu0 0.0
    %1351 = vmatpush.msra.mxu0 0.0
    %1352 = vmatpush.msra.mxu0 0.0
    %1353 = vmatpush.msra.mxu0 0.0
    %1354 = vmatpush.msra.mxu0 0.0
    %1355 = vmatpush.msra.mxu0 0.0
    %1356 = vmatpush.msra.mxu0 %v230
    %1357 = vmatpush.msra.mxu0 %v229
    %1358 = vmatpush.msra.mxu0 %v228
    %1359 = vmatpush.msra.mxu0 %v227
    %1360 = vmatmul.f32.gmra.mxu0 %v1342
    %v1361 = vpop.f32.mrf.mxu0
    %v1362 = vadd.f32 %v320, %v1361
    %1363 = vdwg.mxu0
    %1365 = vrot.lane.b32.xlu0 %v1362, 96
    %v1366 = vpop.permute.xlu0 %1365
    %v1368 = vadd.f32 %v1341, %v1366
    %v1369 = vsub.f32 0.0, %v1368
    %v1370 = vmul.f32 %v1369, 1.442695
    %v1371 = vpow.pop %v1370
    %v1372 = vadd.f32 %v1371, 1.0
    %v1373 = vrcp.pop %v1372
    %v1374 = vmul.f32 %v1372, %v1373
    %v1375 = vsub.f32 1.0, %v1374
    %v1376 = vmul.f32 %v1373, %v1375
    %v1377 = vadd.f32 %v1373, %v1376
    %vm1378 = vweird.f32 %v1372
    %vm1379 = vweird.f32 %v1373
    %vm1380 = vmor %vm1378, %vm1379
    %v1381 = vsel %vm1380, %v1373, %v1377
    %v1382 = vand.u32 2147483647, %v1372
    %vm1383 = vcmp.eq.f32.partialorder %v1382, 8.507059e+37
    %v1384 = vand.u32 %v1372, 2147483648
    %v1385 = vor.u32 1.1754944e-38, %v1384
    %v1386 = vsel %vm1383, %v1385, %v1381
    %v1387 = vmul.f32 1.0, %v1386
    %v1389 = vrot.slane %v1341, 2
    %v1391 = vadd.f32 %v1389, %v1366
    %v1392 = vsub.f32 0.0, %v1391
    %v1393 = vmul.f32 %v1392, 1.442695
    %v1394 = vpow.pop %v1393
    %v1395 = vadd.f32 %v1394, 1.0
    %v1396 = vrcp.pop %v1395
    %v1397 = vmul.f32 %v1395, %v1396
    %v1398 = vsub.f32 1.0, %v1397
    %v1399 = vmul.f32 %v1396, %v1398
    %v1400 = vadd.f32 %v1396, %v1399
    %vm1401 = vweird.f32 %v1395
    %vm1402 = vweird.f32 %v1396
    %vm1403 = vmor %vm1401, %vm1402
    %v1404 = vsel %vm1403, %v1396, %v1400
    %v1405 = vand.u32 2147483647, %v1395
    %vm1406 = vcmp.eq.f32.partialorder %v1405, 8.507059e+37
    %v1407 = vand.u32 %v1395, 2147483648
    %v1408 = vor.u32 1.1754944e-38, %v1407
    %v1409 = vsel %vm1406, %v1408, %v1404
    %v1410 = vmul.f32 1.0, %v1409
    %1411 = vrot.lane.b32.xlu0 %v1362, 32
    %v1412 = vpop.permute.xlu0 %1411
    %v1414 = vmul.f32 %v1387, %v1412
    %1415 = vrot.lane.b32.xlu0 %v1341, 96
    %v1416 = vpop.permute.xlu0 %1415
    %v1417 = vrot.slane %v1416, 2
    %1420 = vrot.lane.b32.xlu0 %v1414, 32
    %v1421 = vpop.permute.xlu0 %1420
    %v1423 = vadd.f32 %v1417, %v1421
    %v1424 = vtanh.pop %v1423
    %v1425 = vsub.f32 1.0, %v1410
    %v1426 = vmul.f32 %v1425, %v1424
    %v1427 = vmul.f32 %v1410, %v1260
    %v1428 = vadd.f32 %v1426, %v1427
    %1430 = vst [vmem:[#allocation1] ss:$4 sm:$0xff] %v1428
    %v1431 = vld.sshfl [vmem:[#allocation1] sm:$0xff pattern:$0x73625140]
    %1432 = vrot.lane.b32.xlu0 %v1431, 32
    %v1433 = vpop.permute.xlu0 %1432
    %1435 = vst.msk [vmem:[%s489] sm:$0x3] %vm414, %v1433
    %v1436 = vld [vmem:[%s305] sm:$0xf]
    %1437 = vst [vmem:[#allocation1] ss:$4 sm:$0xff] %v1333
    %v1438 = vld.sshfl [vmem:[#allocation1] sm:$0xff pattern:$0x73625140]
    %1439 = vrot.lane.b32.xlu0 %v1438, 96
    %v1440 = vpop.permute.xlu0 %1439
    %v1441 = vsel %vm129, %v1440, 0
    %1443 = vmatpush.msra.mxu0 0.0
    %1444 = vmatpush.msra.mxu0 0.0
    %1445 = vmatpush.msra.mxu0 0.0
    %1446 = vmatpush.msra.mxu0 0.0
    %1447 = vmatpush.msra.mxu0 0.0
    %1448 = vmatpush.msra.mxu0 0.0
    %1449 = vmatpush.msra.mxu0 0.0
    %1450 = vmatpush.msra.mxu0 0.0
    %1451 = vmatpush.msra.mxu0 0.0
    %1452 = vmatpush.msra.mxu0 0.0
    %1453 = vmatpush.msra.mxu0 0.0
    %1454 = vmatpush.msra.mxu0 0.0
    %1455 = vmatpush.msra.mxu0 %v225
    %1456 = vmatpush.msra.mxu0 %v224
    %1457 = vmatpush.msra.mxu0 %v223
    %1458 = vmatpush.msra.mxu0 %v222
    %1459 = vmatmul.f32.gmra.mxu0 %v1441
    %v1460 = vpop.f32.mrf.mxu0
    %v1461 = vadd.f32 %v234, %v1460
    %1462 = vdwg.mxu0
    %v1463 = vadd.f32 %v1436, %v1461
    %v1464 = vsub.f32 0.0, %v1463
    %v1465 = vmul.f32 %v1464, 1.442695
    %v1466 = vpow.pop %v1465
    %v1467 = vadd.f32 %v1466, 1.0
    %v1468 = vrcp.pop %v1467
    %v1469 = vmul.f32 %v1467, %v1468
    %v1470 = vsub.f32 1.0, %v1469
    %v1471 = vmul.f32 %v1468, %v1470
    %v1472 = vadd.f32 %v1468, %v1471
    %vm1473 = vweird.f32 %v1467
    %vm1474 = vweird.f32 %v1468
    %vm1475 = vmor %vm1473, %vm1474
    %v1476 = vsel %vm1475, %v1468, %v1472
    %v1477 = vand.u32 2147483647, %v1467
    %vm1478 = vcmp.eq.f32.partialorder %v1477, 8.507059e+37
    %v1479 = vand.u32 %v1467, 2147483648
    %v1480 = vor.u32 1.1754944e-38, %v1479
    %v1481 = vsel %vm1478, %v1480, %v1476
    %v1482 = vmul.f32 1.0, %v1481
    %1484 = vrot.lane.b32.xlu0 %v1461, 64
    %v1485 = vpop.permute.xlu0 %1484
    %v1487 = vmul.f32 %v1482, %v1485
    %1489 = vrot.lane.b32.xlu0 %v1487, 64
    %v1490 = vpop.permute.xlu0 %1489
    %v1492 = vadd.f32 %v1436, %v1490
    %v1493 = vtanh.pop %v1492
    %v1494 = vsub.f32 1.0, %v1482
    %1496 = vrot.lane.b32.xlu0 %v1493, 96
    %v1497 = vpop.permute.xlu0 %1496
    %v1499 = vmul.f32 %v1494, %v1497
    %v1500 = vmul.f32 %v1482, %v1333
    %v1501 = vadd.f32 %v1499, %v1500
    %1503 = vst [vmem:[#allocation1] ss:$4 sm:$0xff] %v1501
    %v1504 = vld.sshfl [vmem:[#allocation1] sm:$0xff pattern:$0x73625140]
    %1505 = vrot.lane.b32.xlu0 %v1504, 96
    %v1506 = vpop.permute.xlu0 %1505
    %1508 = vst.msk [vmem:[%s413] sm:$0x3] %vm303, %v1506
    %v1509 = vld [vmem:[#allocation2] sm:$0xf]
    %v1510 = vsel %vm129, %v1428, 0
    %1512 = vmatpush.msra.mxu0 0.0
    %1513 = vmatpush.msra.mxu0 0.0
    %1514 = vmatpush.msra.mxu0 0.0
    %1515 = vmatpush.msra.mxu0 0.0
    %1516 = vmatpush.msra.mxu0 0.0
    %1517 = vmatpush.msra.mxu0 0.0
    %1518 = vmatpush.msra.mxu0 0.0
    %1519 = vmatpush.msra.mxu0 0.0
    %1520 = vmatpush.msra.mxu0 0.0
    %1521 = vmatpush.msra.mxu0 0.0
    %1522 = vmatpush.msra.mxu0 0.0
    %1523 = vmatpush.msra.mxu0 0.0
    %1524 = vmatpush.msra.mxu0 %v230
    %1525 = vmatpush.msra.mxu0 %v229
    %1526 = vmatpush.msra.mxu0 %v228
    %1527 = vmatpush.msra.mxu0 %v227
    %1528 = vmatmul.f32.gmra.mxu0 %v1510
    %v1529 = vpop.f32.mrf.mxu0
    %v1530 = vadd.f32 %v320, %v1529
    %1531 = vdwg.mxu0
    %1533 = vrot.lane.b32.xlu0 %v1530, 96
    %v1534 = vpop.permute.xlu0 %1533
    %v1536 = vadd.f32 %v1509, %v1534
    %v1537 = vsub.f32 0.0, %v1536
    %v1538 = vmul.f32 %v1537, 1.442695
    %v1539 = vpow.pop %v1538
    %v1540 = vadd.f32 %v1539, 1.0
    %v1541 = vrcp.pop %v1540
    %v1542 = vmul.f32 %v1540, %v1541
    %v1543 = vsub.f32 1.0, %v1542
    %v1544 = vmul.f32 %v1541, %v1543
    %v1545 = vadd.f32 %v1541, %v1544
    %vm1546 = vweird.f32 %v1540
    %vm1547 = vweird.f32 %v1541
    %vm1548 = vmor %vm1546, %vm1547
    %v1549 = vsel %vm1548, %v1541, %v1545
    %v1550 = vand.u32 2147483647, %v1540
    %vm1551 = vcmp.eq.f32.partialorder %v1550, 8.507059e+37
    %v1552 = vand.u32 %v1540, 2147483648
    %v1553 = vor.u32 1.1754944e-38, %v1552
    %v1554 = vsel %vm1551, %v1553, %v1549
    %v1555 = vmul.f32 1.0, %v1554
    %v1557 = vrot.slane %v1509, 2
    %v1559 = vadd.f32 %v1557, %v1534
    %v1560 = vsub.f32 0.0, %v1559
    %v1561 = vmul.f32 %v1560, 1.442695
    %v1562 = vpow.pop %v1561
    %v1563 = vadd.f32 %v1562, 1.0
    %v1564 = vrcp.pop %v1563
    %v1565 = vmul.f32 %v1563, %v1564
    %v1566 = vsub.f32 1.0, %v1565
    %v1567 = vmul.f32 %v1564, %v1566
    %v1568 = vadd.f32 %v1564, %v1567
    %vm1569 = vweird.f32 %v1563
    %vm1570 = vweird.f32 %v1564
    %vm1571 = vmor %vm1569, %vm1570
    %v1572 = vsel %vm1571, %v1564, %v1568
    %v1573 = vand.u32 2147483647, %v1563
    %vm1574 = vcmp.eq.f32.partialorder %v1573, 8.507059e+37
    %v1575 = vand.u32 %v1563, 2147483648
    %v1576 = vor.u32 1.1754944e-38, %v1575
    %v1577 = vsel %vm1574, %v1576, %v1572
    %v1578 = vmul.f32 1.0, %v1577
    %1579 = vrot.lane.b32.xlu0 %v1530, 32
    %v1580 = vpop.permute.xlu0 %1579
    %v1582 = vmul.f32 %v1555, %v1580
    %1583 = vrot.lane.b32.xlu0 %v1509, 96
    %v1584 = vpop.permute.xlu0 %1583
    %v1585 = vrot.slane %v1584, 2
    %1588 = vrot.lane.b32.xlu0 %v1582, 32
    %v1589 = vpop.permute.xlu0 %1588
    %v1591 = vadd.f32 %v1585, %v1589
    %v1592 = vtanh.pop %v1591
    %v1593 = vsub.f32 1.0, %v1578
    %v1594 = vmul.f32 %v1593, %v1592
    %v1595 = vmul.f32 %v1578, %v1428
    %v1596 = vadd.f32 %v1594, %v1595
    %1598 = vst [vmem:[#allocation1] ss:$4 sm:$0xff] %v1596
    %v1599 = vld.sshfl [vmem:[#allocation1] sm:$0xff pattern:$0x73625140]
    %1600 = vrot.lane.b32.xlu0 %v1599, 32
    %v1601 = vpop.permute.xlu0 %1600
    %1603 = vst.msk [vmem:[#allocation11] sm:$0x3] %vm414, %v1601
    %1604 = vst [vmem:[#allocation1] ss:$4 sm:$0xff] %v1501
    %v1605 = vld.sshfl [vmem:[#allocation1] sm:$0xff pattern:$0x73625140]
    %1606 = vrot.lane.b32.xlu0 %v1605, 96
    %v1607 = vpop.permute.xlu0 %1606
    %1609 = vst.msk [vmem:[#allocation12] sm:$0x3] %vm303, %v1607
    %1610 = vst [vmem:[#allocation1] ss:$4 sm:$0xff] %v1596
    %v1611 = vld.sshfl [vmem:[#allocation1] sm:$0xff pattern:$0x73625140]
    %1612 = vrot.lane.b32.xlu0 %v1611, 32
    %v1613 = vpop.permute.xlu0 %1612
    %1615 = vst.msk [vmem:[#allocation12] sm:$0x3] %vm414, %v1613
    // Predicated region
    $region34: #{tpu_custom_call.1} parent=1 // pred_check
      _
    $region35: #{tpu_custom_call.1} parent=1 // pred_check_branch
      %1617 = sbr.rel (0) target = $region37
    $region36: #{tpu_custom_call.1} parent=1 // pred_region
      %1619 = vsyncadd [#allocation5], 0
      %s1620 = sshll.u32 [#allocation11], 4
      %s1621 = int_to_ptr.vmem [resolvable:$true] %s1620
      %s1622 = sshll.u32 %s4, 4
      %s1623 = int_to_ptr.hbm [resolvable:$true] %s1622
      %1628 = dma.vmem_to_hbm [thread:$0]  %s1621, 256, %s1623, [#allocation5], 32, 32, 2
    $region37: #{tpu_custom_call.1} parent=1 // pred_fallthru
      _
    // Predicated region
    $region38: #{tpu_custom_call.1} parent=1 // pred_check
      _
    $region39: #{tpu_custom_call.1} parent=1 // pred_check_branch
      %1630 = sbr.rel (0) target = $region41
    $region40: #{tpu_custom_call.1} parent=1 // pred_region
      %1632 = vsyncadd [#allocation13], 0
      %s1634 = sshll.u32 [#allocation12], 4
      %s1635 = int_to_ptr.vmem [resolvable:$true] %s1634
      %s1636 = sshll.u32 %s5, 4
      %s1637 = int_to_ptr.hbm [resolvable:$true] %s1636
      %1639 = dma.vmem_to_hbm [thread:$0]  %s1635, 32, %s1637, [#allocation13]
    $region41: #{tpu_custom_call.1} parent=1 // pred_fallthru
      _
    // Predicated region
    $region42: #{tpu_custom_call.1} parent=1 // pred_check
      _
    $region43: #{tpu_custom_call.1} parent=1 // pred_check_branch
      %1641 = sbr.rel (0) target = $region45
    $region44: #{tpu_custom_call.1} parent=1 // pred_region
      %1643 = dma.done [#allocation5], 256
    $region45: #{tpu_custom_call.1} parent=1 // pred_fallthru
      _
    // Predicated region
    $region46: #{tpu_custom_call.1} parent=1 // pred_check
      _
    $region47: #{tpu_custom_call.1} parent=1 // pred_check_branch
      %1645 = sbr.rel (0) target = $region49
    $region48: #{tpu_custom_call.1} parent=1 // pred_region
      %1647 = dma.done [#allocation13], 32
    $region49: #{tpu_custom_call.1} parent=1 // pred_fallthru
      _
    %1648 = vsyncpa [#allocation4], 1
    %1649 = vsyncpa [#allocation7], 1
    %1650 = vsyncpa [#allocation10], 1
    %1651 = vsyncpa [#allocation5], 1
    %1652 = vsyncpa [#allocation13], 1

</llo_original>
